<compile_context>
chip_gen: v7x
topology: tpu7x:2x2x1
jax: 0.10.0
libtpu: 0.0.40
codegen_flags: <defaults>
</compile_context>

<pallas_src>
import jax
import jax.numpy as jnp
from jax.experimental import pallas as pl
from jax.experimental.pallas import tpu as pltpu

_MIB = 1024 * 1024


def _cdiv(a, b):
    return -(-a // b)


def _round_up(a, b):
    return _cdiv(a, b) * b


def _pad_to(a, shape):
    pads = [(0, s - d) for d, s in zip(a.shape, shape)]
    if any(p[1] for p in pads):
        return jnp.pad(a, pads)
    return a


def _tpu_tile_config():
    """Generation-gated (max_tk, vmem_limit_bytes).

    v5e/v6e have 128 MiB physical VMEM -> large K tile, 48 MiB scoped limit.
    v7x has only 64 MiB physical VMEM -> smaller tile, 32 MiB limit.
    Unknown hardware falls back to the conservative (v7x) numbers.
    """
    vmem_cap = None
    try:
        info = pltpu.get_tpu_info()
        vmem_cap = getattr(info, "vmem_capacity_bytes", None)
    except Exception:
        vmem_cap = None
    if vmem_cap is not None and vmem_cap >= 96 * _MIB:
        return 16384, 48 * _MIB          # v5e / v6e
    return 8192, 32 * _MIB               # v7x or unknown


def _mlp_kernel_fused(x_ref, w1_ref, b1_ref, w2_ref, b2_ref, w3_ref, b3_ref,
                      o_ref):
    """Grid-free fused 3-layer MLP: whole (padded) fc_layer resident in VMEM,
    no accumulator scratch, no phase logic, no double buffering."""
    h1 = jnp.dot(x_ref[...], w1_ref[...], preferred_element_type=jnp.float32)
    h1 = jnp.maximum(h1 + b1_ref[...], 0.0)          # ReLU (+ identity Dropout)
    h2 = jnp.dot(h1.astype(w2_ref.dtype), w2_ref[...],
                 preferred_element_type=jnp.float32)
    h2 = jnp.maximum(h2 + b2_ref[...], 0.0)
    y = jnp.dot(h2.astype(w3_ref.dtype), w3_ref[...],
                preferred_element_type=jnp.float32)
    o_ref[...] = (y + b3_ref[...]).astype(o_ref.dtype)


def _mlp_kernel_streamed(x_ref, w1_ref, b1_ref, w2_ref, b2_ref, w3_ref, b3_ref,
                         o_ref, acc_ref):
    """Grid = (num_m, num_k): axis 0 tiles the batch (parallel), axis 1 tiles
    the large fc_layer reduction of Linear-1 (arbitrary). Layers 2/3 run once
    per M block at the final K step."""
    k = pl.program_id(1)

    @pl.when(k == 0)
    def _():
        acc_ref[...] = jnp.zeros_like(acc_ref)

    # Partial product of Linear-1 over this K chunk (bf16 inputs, f32 acc).
    acc_ref[...] += jnp.dot(x_ref[...], w1_ref[...],
                            preferred_element_type=jnp.float32)

    @pl.when(k == pl.num_programs(1) - 1)
    def _():
        h1 = jnp.maximum(acc_ref[...] + b1_ref[...], 0.0)
        h2 = jnp.dot(h1.astype(w2_ref.dtype), w2_ref[...],
                     preferred_element_type=jnp.float32)
        h2 = jnp.maximum(h2 + b2_ref[...], 0.0)
        y = jnp.dot(h2.astype(w3_ref.dtype), w3_ref[...],
                    preferred_element_type=jnp.float32)
        o_ref[...] = (y + b3_ref[...]).astype(o_ref.dtype)


def make_pose_confidence_vgg(params, *, max_tk=None, vmem_limit_bytes=None,
                             compute_dtype=jnp.bfloat16):
    """Prepares weights once (cast + pad + layout) and returns forward(x).

    params: (w1 (fc,512), b1 (512,), w2 (512,256), b2 (256,), w3 (256,out), b3 (out,))
    forward(x) accepts any shape whose trailing elements flatten to fc_layer
    per row and returns (B, out) float32 logits.
    """
    w1, b1, w2, b2, w3, b3 = params
    fc_layer, H1 = w1.shape          # (fc_layer, 512)
    H2 = w2.shape[1]                 # 256
    OUT = w3.shape[1]                # 2

    auto_tk, auto_limit = _tpu_tile_config()
    if max_tk is None:
        max_tk = auto_tk
    if vmem_limit_bytes is None:
        vmem_limit_bytes = auto_limit
    assert max_tk % 128 == 0, "max_tk must be a multiple of 128"

    OUT_pad = max(128, _round_up(OUT, 128))      # lane-dense output store
    K128 = _round_up(fc_layer, 128)
    if K128 <= max_tk:
        tk, num_k = K128, 1
    else:
        tk, num_k = max_tk, _cdiv(K128, max_tk)
    K_pad = tk * num_k

    # --- One-time weight prep (hoisted out of the per-call path). ---
    w1_p = _pad_to(w1.astype(compute_dtype), (K_pad, H1))
    w2_c = w2.astype(compute_dtype)
    w3_p = _pad_to(w3.astype(compute_dtype), (H2, OUT_pad))
    b1r = b1.reshape(1, H1).astype(jnp.float32)
    b2r = b2.reshape(1, H2).astype(jnp.float32)
    b3r = _pad_to(b3.reshape(1, OUT).astype(jnp.float32), (1, OUT_pad))

    def _fused_call(xp, B_pad):
        return pl.pallas_call(
            _mlp_kernel_fused,
            out_shape=jax.ShapeDtypeStruct((B_pad, OUT_pad), jnp.float32),
            compiler_params=pltpu.CompilerParams(
                vmem_limit_bytes=vmem_limit_bytes),
        )(xp, w1_p, b1r, w2_c, b2r, w3_p, b3r)

    def _streamed_call(xp, B_pad, tm, num_m, use_hint):
        def const_spec(shape):
            # Resident operands: single-buffered when pipeline hints exist.
            if use_hint:
                return pl.BlockSpec(shape, lambda m, k: (0, 0),
                                    pipeline_mode=pl.Buffered(1))
            return pl.BlockSpec(shape, lambda m, k: (0, 0))

        grid_spec = pltpu.PrefetchScalarGridSpec(
            num_scalar_prefetch=0,
            grid=(num_m, num_k),
            in_specs=[
                pl.BlockSpec((tm, tk), lambda m, k: (m, k)),     # x chunk
                pl.BlockSpec((tk, H1), lambda m, k: (k, 0)),     # W1 chunk
                const_spec((1, H1)),                             # b1
                const_spec((H1, H2)),                            # W2 (resident)
                const_spec((1, H2)),                             # b2
                const_spec((H2, OUT_pad)),                       # W3 (resident)
                const_spec((1, OUT_pad)),                        # b3
            ],
            out_specs=pl.BlockSpec((tm, OUT_pad), lambda m, k: (m, 0)),
            scratch_shapes=[pltpu.VMEM((tm, H1), jnp.float32)],
        )
        return pl.pallas_call(
            _mlp_kernel_streamed,
            out_shape=jax.ShapeDtypeStruct((B_pad, OUT_pad), jnp.float32),
            grid_spec=grid_spec,
            compiler_params=pltpu.CompilerParams(
                dimension_semantics=("parallel", "arbitrary"),
                vmem_limit_bytes=vmem_limit_bytes),
        )(xp, w1_p, b1r, w2_c, b2r, w3_p, b3r)

    def forward(x):
        xf = x.reshape(-1, fc_layer).astype(compute_dtype)   # == x.view(-1, fc)
        B = xf.shape[0]
        if B <= 128:
            tm = max(16, _round_up(B, 16))   # bf16 sublane granule
            num_m = 1
        else:
            tm = 128                         # M grid axis for large batches
            num_m = _cdiv(B, tm)
        B_pad = tm * num_m
        xp = _pad_to(xf, (B_pad, K_pad))     # cheap per-call pad (x only)

        if num_k == 1 and num_m == 1:
            y = _fused_call(xp, B_pad)
        else:
            use_hint = hasattr(pl, "Buffered")
            if use_hint:
                # Graceful fallback if pipeline_mode=Buffered(1) is not
                # supported by this jax version (only valid when forward is
                # called eagerly; pass use_hint=False under an outer jit if
                # lowering rejects it there).
                try:
                    y = _streamed_call(xp, B_pad, tm, num_m, True)
                except Exception:
                    y = _streamed_call(xp, B_pad, tm, num_m, False)
            else:
                y = _streamed_call(xp, B_pad, tm, num_m, False)
        return y[:B, :OUT]

    return forward


def init_params(key, fc_layer, out=2, dtype=jnp.float32):
    """Deterministic init mirroring nn.Linear default (U[-1/sqrt(fan_in), +])."""
    def linear(key, fan_in, fan_out):
        kw, kb = jax.random.split(key)
        bound = 1.0 / (fan_in ** 0.5)
        w = jax.random.uniform(kw, (fan_in, fan_out), dtype, -bound, bound)
        b = jax.random.uniform(kb, (fan_out,), dtype, -bound, bound)
        return w, b

    k1, k2, k3 = jax.random.split(key, 3)
    w1, b1 = linear(k1, fc_layer, 512)
    w2, b2 = linear(k2, 512, 256)
    w3, b3 = linear(k3, 256, out)
    return (w1, b1, w2, b2, w3, b3)


def reference_forward(x, params, *, mixed=False):
    """Plain-JAX reference. mixed=True mimics the kernel's bf16-input /
    f32-accumulate matmuls for a tight numerical comparison."""
    w1, b1, w2, b2, w3, b3 = params
    xf = x.reshape(-1, w1.shape[0])
    c = (lambda a: a.astype(jnp.bfloat16)) if mixed else (lambda a: a)
    h1 = jnp.maximum(jnp.dot(c(xf), c(w1), preferred_element_type=jnp.float32) + b1, 0.0)
    h2 = jnp.maximum(jnp.dot(c(h1), c(w2), preferred_element_type=jnp.float32) + b2, 0.0)
    return jnp.dot(c(h2), c(w3), preferred_element_type=jnp.float32) + b3


if __name__ == "__main__":
    key = jax.random.PRNGKey(0)
    kx, kp = jax.random.split(key)

    # Small shapes consistent with the module: (B=2, C=4, H=16, W=16)
    # -> fc_layer = 4*16*16 = 1024, out = 2.
    B, C, H, W = 2, 4, 16, 16
    fc_layer = C * H * W
    x = jax.random.normal(kx, (B, C, H, W), jnp.float32)
    params = init_params(kp, fc_layer, out=2)

    y_mixed_ref = reference_forward(x, params, mixed=True)
    y_f32_ref = reference_forward(x, params, mixed=False)

    # 1) Fused grid-free path (whole padded fc_layer resident in VMEM).
    fwd = make_pose_confidence_vgg(params)
    y = jax.block_until_ready(fwd(x))
    assert y.shape == (B, 2)
    assert jnp.allclose(y, y_mixed_ref, atol=5e-3, rtol=5e-3), "fused path mismatch"
    assert jnp.allclose(y, y_f32_ref, atol=2e-2, rtol=2e-2), "fused path drift vs f32"

    # 2) K-streamed path (force small tile to exercise grid + accumulator).
    fwd_small = make_pose_confidence_vgg(params, max_tk=256)
    y2 = jax.block_until_ready(fwd_small(x))
    assert jnp.allclose(y2, y_mixed_ref, atol=5e-3, rtol=5e-3), "streamed path mismatch"

    # 3) Ragged fc_layer (not a multiple of 128) exercises zero-padding.
    fc3 = 3 * 10 * 10
    x3 = jax.random.normal(kx, (3, 3, 10, 10), jnp.float32)
    params3 = init_params(kp, fc3, out=2)
    fwd3 = make_pose_confidence_vgg(params3, max_tk=256)
    y3 = jax.block_until_ready(fwd3(x3))
    y3_ref = reference_forward(x3, params3, mixed=True)
    assert y3.shape == (3, 2)
    assert jnp.allclose(y3, y3_ref, atol=5e-3, rtol=5e-3), "ragged path mismatch"

    # 4) Large batch exercises the M grid axis (parallel 128-row blocks).
    x4 = jax.random.normal(kx, (130, fc3), jnp.float32)
    y4 = jax.block_until_ready(fwd3(x4))
    y4_ref = reference_forward(x4, params3, mixed=True)
    assert y4.shape == (130, 2)
    assert jnp.allclose(y4, y4_ref, atol=5e-3, rtol=5e-3), "batched path mismatch"

    print("KERNEL_OK")
</pallas_src>

<mosaic_0001>
module attributes {stable_mosaic.version = 11 : i64} {
  func.func @_mlp_kernel_fused(%arg0: memref<16x1024xbf16, #tpu.memory_space<vmem>>, %arg1: memref<1024x512xbf16, #tpu.memory_space<vmem>>, %arg2: memref<1x512xf32, #tpu.memory_space<vmem>>, %arg3: memref<512x256xbf16, #tpu.memory_space<vmem>>, %arg4: memref<1x256xf32, #tpu.memory_space<vmem>>, %arg5: memref<256x128xbf16, #tpu.memory_space<vmem>>, %arg6: memref<1x128xf32, #tpu.memory_space<vmem>>, %arg7: memref<16x128xf32, #tpu.memory_space<vmem>>) attributes {dimension_semantics = [], scalar_prefetch = 0 : i64, scratch_operands = 0 : i64, tpu.core_type = #tpu.core_type<tc>} {
    %c0 = arith.constant 0 : index
    %c0_0 = arith.constant 0 : index
    %0 = vector.load %arg0[%c0, %c0_0] : memref<16x1024xbf16, #tpu.memory_space<vmem>>, vector<16x1024xbf16>
    %c0_1 = arith.constant 0 : index
    %c0_2 = arith.constant 0 : index
    %1 = vector.load %arg1[%c0_1, %c0_2] : memref<1024x512xbf16, #tpu.memory_space<vmem>>, vector<1024x512xbf16>
    %cst = arith.constant dense<0.000000e+00> : vector<16x512xf32>
    %2 = tpu.matmul %0, %1, %cst {dimension_numbers = #tpu.dot_dimension_numbers<[1], [0], [0], [1], [0, 0, 1, 1], [], []>} : vector<16x1024xbf16>, vector<1024x512xbf16>, vector<16x512xf32> -> vector<16x512xf32>
    %c0_3 = arith.constant 0 : index
    %c0_4 = arith.constant 0 : index
    %3 = vector.load %arg2[%c0_3, %c0_4] : memref<1x512xf32, #tpu.memory_space<vmem>>, vector<1x512xf32>
    %4 = vector.broadcast %3 : vector<1x512xf32> to vector<16x512xf32>
    %5 = arith.addf %2, %4 : vector<16x512xf32>
    %cst_5 = arith.constant 0.000000e+00 : f32
    %6 = vector.broadcast %cst_5 : f32 to vector<16x512xf32>
    %7 = arith.maximumf %5, %6 : vector<16x512xf32>
    %8 = arith.truncf %7 : vector<16x512xf32> to vector<16x512xbf16>
    %c0_6 = arith.constant 0 : index
    %c0_7 = arith.constant 0 : index
    %9 = vector.load %arg3[%c0_6, %c0_7] : memref<512x256xbf16, #tpu.memory_space<vmem>>, vector<512x256xbf16>
    %cst_8 = arith.constant dense<0.000000e+00> : vector<16x256xf32>
    %10 = tpu.matmul %8, %9, %cst_8 {dimension_numbers = #tpu.dot_dimension_numbers<[1], [0], [0], [1], [0, 0, 1, 1], [], []>} : vector<16x512xbf16>, vector<512x256xbf16>, vector<16x256xf32> -> vector<16x256xf32>
    %c0_9 = arith.constant 0 : index
    %c0_10 = arith.constant 0 : index
    %11 = vector.load %arg4[%c0_9, %c0_10] : memref<1x256xf32, #tpu.memory_space<vmem>>, vector<1x256xf32>
    %12 = vector.broadcast %11 : vector<1x256xf32> to vector<16x256xf32>
    %13 = arith.addf %10, %12 : vector<16x256xf32>
    %cst_11 = arith.constant 0.000000e+00 : f32
    %14 = vector.broadcast %cst_11 : f32 to vector<16x256xf32>
    %15 = arith.maximumf %13, %14 : vector<16x256xf32>
    %16 = arith.truncf %15 : vector<16x256xf32> to vector<16x256xbf16>
    %c0_12 = arith.constant 0 : index
    %c0_13 = arith.constant 0 : index
    %17 = vector.load %arg5[%c0_12, %c0_13] : memref<256x128xbf16, #tpu.memory_space<vmem>>, vector<256x128xbf16>
    %cst_14 = arith.constant dense<0.000000e+00> : vector<16x128xf32>
    %18 = tpu.matmul %16, %17, %cst_14 {dimension_numbers = #tpu.dot_dimension_numbers<[1], [0], [0], [1], [0, 0, 1, 1], [], []>} : vector<16x256xbf16>, vector<256x128xbf16>, vector<16x128xf32> -> vector<16x128xf32>
    %c0_15 = arith.constant 0 : index
    %c0_16 = arith.constant 0 : index
    %19 = vector.load %arg6[%c0_15, %c0_16] : memref<1x128xf32, #tpu.memory_space<vmem>>, vector<1x128xf32>
    %20 = vector.broadcast %19 : vector<1x128xf32> to vector<16x128xf32>
    %21 = arith.addf %18, %20 : vector<16x128xf32>
    %c0_17 = arith.constant 0 : index
    %c0_18 = arith.constant 0 : index
    %22 = vector.load %arg7[%c0_17, %c0_18] : memref<16x128xf32, #tpu.memory_space<vmem>>, vector<16x128xf32>
    tpu.vector_store %arg7[%c0_17, %c0_18], %21 {strides = array<i32>} : memref<16x128xf32, #tpu.memory_space<vmem>>, vector<16x128xf32>,
    return
  }
}

</mosaic_0001>

<llo_original>
// kernel: tpu_custom_call.1
$region0: #{tpu_custom_call.1}
  #allocation0 [shape = 'u32[]', space=smem, size = 0x4, offset = 0x4, fixed_abs, tag = 'smem constant byte address 0x4 - core index']
  #allocation1 [shape = 'u32[144,128]{1,0:T(1,128)}', space=vmem, size = 0x12000, scoped, tag = 'internal scratch']
  %s0 = inlined_call_operand.hbm [shape: bf16[16,1024], index: 0, kind: input, shape index: {}]
  %s1 = inlined_call_operand.hbm [shape: bf16[1024,512], index: 1, kind: input, shape index: {}]
  %s2 = inlined_call_operand.vmem [shape: f32[1,512], index: 2, kind: input, shape index: {}]
  %s3 = inlined_call_operand.hbm [shape: bf16[512,256], index: 3, kind: input, shape index: {}]
  %s4 = inlined_call_operand.vmem [shape: f32[1,256], index: 4, kind: input, shape index: {}]
  %s5 = inlined_call_operand.hbm [shape: bf16[256,128], index: 5, kind: input, shape index: {}]
  %s6 = inlined_call_operand.vmem [shape: f32[1,128], index: 6, kind: input, shape index: {}]
  %s7 = inlined_call_operand.hbm [shape: f32[16,128], index: 7, kind: output, shape index: {}]
  %s8 = sld [smem:[#allocation0]]
  $region54: #{tpu_custom_call.1} parent=0
    _
  %s10 = ssub.s32 1, %s8
  %s11 = scalar_select 0, %s10, %s8
  $region1: #{tpu_custom_call.1} parent=0
    #allocation2 [shape = 'u8[32768]{0}', space=vmem, size = 0x8000, scoped, tag = 'input window, operand 0, single buffered']
    #allocation3 [shape = 's32[1]{0}', space=sflag, size = 0x4, scoped, tag = 'scoped memory for tpu_custom_call.1']
    #allocation4 [shape = 's32[1]{0}', space=sflag, size = 0x4, scoped, tag = 'scoped memory for tpu_custom_call.1']
    #allocation5 [shape = 'u8[1048576]{0}', space=vmem, size = 0x100000, scoped, tag = 'input window, operand 1, single buffered']
    #allocation6 [shape = 's32[1]{0}', space=sflag, size = 0x4, scoped, tag = 'scoped memory for tpu_custom_call.1']
    #allocation7 [shape = 'u8[262144]{0}', space=vmem, size = 0x40000, scoped, tag = 'input window, operand 3, single buffered']
    #allocation8 [shape = 'u8[65536]{0}', space=vmem, size = 0x10000, scoped, tag = 'input window, operand 5, single buffered']
    #allocation9 [shape = 's32[1]{0}', space=sflag, size = 0x4, scoped, tag = 'scoped memory for tpu_custom_call.1']
    #allocation10 [shape = 'u8[8192]{0}', space=vmem, size = 0x2000, scoped, tag = 'output window, operand 0, single buffered']
    %12 = vsyncpa [#allocation3], 0
    %13 = vsyncpa [#allocation6], 0
    %14 = vsyncpa [#allocation9], 0
    %15 = vsyncpa [#allocation4], 0
    // Predicated region
    $region2: #{tpu_custom_call.1} parent=1 // pred_check
      _
    $region3: #{tpu_custom_call.1} parent=1 // pred_check_branch
      %17 = sbr.rel (0) target = $region5
    $region4: #{tpu_custom_call.1} parent=1 // pred_region
      %s19 = ssub.s32 1024, 1024
      %20 = vsyncadd [#allocation3], %s19
      %s21 = sshll.u32 [#allocation2], 4
      %s22 = int_to_ptr.vmem [resolvable:$true] %s21
      %27 = dma.hbm_to_vmem [thread:$0]  %s0, 1024, %s22, [#allocation3], 512, 512, 32
    $region5: #{tpu_custom_call.1} parent=1 // pred_fallthru
      _
    // Predicated region
    $region6: #{tpu_custom_call.1} parent=1 // pred_check
      _
    $region7: #{tpu_custom_call.1} parent=1 // pred_check_branch
      %29 = sbr.rel (0) target = $region9
    $region8: #{tpu_custom_call.1} parent=1 // pred_region
      %s31 = ssub.s32 32768, 32768
      %32 = vsyncadd [#allocation6], %s31
      %s33 = sshll.u32 [#allocation5], 4
      %s34 = int_to_ptr.vmem [resolvable:$true] %s33
      %39 = dma.hbm_to_vmem [thread:$0]  %s1, 32768, %s34, [#allocation6], 256, 256, 16
    $region9: #{tpu_custom_call.1} parent=1 // pred_fallthru
      _
    // Predicated region
    $region10: #{tpu_custom_call.1} parent=1 // pred_check
      _
    $region11: #{tpu_custom_call.1} parent=1 // pred_check_branch
      %41 = sbr.rel (0) target = $region13
    $region12: #{tpu_custom_call.1} parent=1 // pred_region
      _
    $region13: #{tpu_custom_call.1} parent=1 // pred_fallthru
      _
    // Predicated region
    $region14: #{tpu_custom_call.1} parent=1 // pred_check
      _
    $region15: #{tpu_custom_call.1} parent=1 // pred_check_branch
      %43 = sbr.rel (0) target = $region17
    $region16: #{tpu_custom_call.1} parent=1 // pred_region
      %s45 = ssub.s32 8192, 8192
      %46 = vsyncadd [#allocation6], %s45
      %s47 = sshll.u32 [#allocation7], 4
      %s48 = int_to_ptr.vmem [resolvable:$true] %s47
      %53 = dma.hbm_to_vmem [thread:$0]  %s3, 8192, %s48, [#allocation6], 128, 128, 8
    $region17: #{tpu_custom_call.1} parent=1 // pred_fallthru
      _
    // Predicated region
    $region18: #{tpu_custom_call.1} parent=1 // pred_check
      _
    $region19: #{tpu_custom_call.1} parent=1 // pred_check_branch
      %55 = sbr.rel (0) target = $region21
    $region20: #{tpu_custom_call.1} parent=1 // pred_region
      _
    $region21: #{tpu_custom_call.1} parent=1 // pred_fallthru
      _
    // Predicated region
    $region22: #{tpu_custom_call.1} parent=1 // pred_check
      _
    $region23: #{tpu_custom_call.1} parent=1 // pred_check_branch
      %57 = sbr.rel (0) target = $region25
    $region24: #{tpu_custom_call.1} parent=1 // pred_region
      %s59 = ssub.s32 2048, 2048
      %60 = vsyncadd [#allocation9], %s59
      %s61 = sshll.u32 [#allocation8], 4
      %s62 = int_to_ptr.vmem [resolvable:$true] %s61
      %67 = dma.hbm_to_vmem [thread:$0]  %s5, 2048, %s62, [#allocation9], 64, 64, 4
    $region25: #{tpu_custom_call.1} parent=1 // pred_fallthru
      _
    // Predicated region
    $region26: #{tpu_custom_call.1} parent=1 // pred_check
      _
    $region27: #{tpu_custom_call.1} parent=1 // pred_check_branch
      %69 = sbr.rel (0) target = $region29
    $region28: #{tpu_custom_call.1} parent=1 // pred_region
      _
    $region29: #{tpu_custom_call.1} parent=1 // pred_fallthru
      _
    // Predicated region
    $region30: #{tpu_custom_call.1} parent=1 // pred_check
      _
    $region31: #{tpu_custom_call.1} parent=1 // pred_check_branch
      %71 = sbr.rel (0) target = $region33
    $region32: #{tpu_custom_call.1} parent=1 // pred_region
      %72 = dma.done [#allocation3], 1024
    $region33: #{tpu_custom_call.1} parent=1 // pred_fallthru
      _
    // Predicated region
    $region34: #{tpu_custom_call.1} parent=1 // pred_check
      _
    $region35: #{tpu_custom_call.1} parent=1 // pred_check_branch
      %74 = sbr.rel (0) target = $region37
    $region36: #{tpu_custom_call.1} parent=1 // pred_region
      %75 = dma.done [#allocation6], 32768
    $region37: #{tpu_custom_call.1} parent=1 // pred_fallthru
      _
    // Predicated region
    $region38: #{tpu_custom_call.1} parent=1 // pred_check
      _
    $region39: #{tpu_custom_call.1} parent=1 // pred_check_branch
      %77 = sbr.rel (0) target = $region41
    $region40: #{tpu_custom_call.1} parent=1 // pred_region
      %78 = dma.done [#allocation6], 8192
    $region41: #{tpu_custom_call.1} parent=1 // pred_fallthru
      _
    // Predicated region
    $region42: #{tpu_custom_call.1} parent=1 // pred_check
      _
    $region43: #{tpu_custom_call.1} parent=1 // pred_check_branch
      %80 = sbr.rel (0) target = $region45
    $region44: #{tpu_custom_call.1} parent=1 // pred_region
      %81 = dma.done [#allocation9], 2048
    $region45: #{tpu_custom_call.1} parent=1 // pred_fallthru
      _
    %v83 = vld [vmem:[#allocation2] sm:$0xff]
    %v84 = vld [vmem:[#allocation2 + $0x8] sm:$0xff]
    %v85 = vld [vmem:[#allocation2 + $0x10] sm:$0xff]
    %v86 = vld [vmem:[#allocation2 + $0x18] sm:$0xff]
    %v87 = vld [vmem:[#allocation2 + $0x20] sm:$0xff]
    %v88 = vld [vmem:[#allocation2 + $0x28] sm:$0xff]
    %v89 = vld [vmem:[#allocation2 + $0x30] sm:$0xff]
    %v90 = vld [vmem:[#allocation2 + $0x38] sm:$0xff]
    %v91 = vld [vmem:[#allocation5] sm:$0xff]
    %v92 = vld [vmem:[#allocation5 + $0x8] sm:$0xff]
    %v93 = vld [vmem:[#allocation5 + $0x10] sm:$0xff]
    %v94 = vld [vmem:[#allocation5 + $0x18] sm:$0xff]
    %v95 = vld [vmem:[#allocation5 + $0x20] sm:$0xff]
    %v96 = vld [vmem:[#allocation5 + $0x28] sm:$0xff]
    %v97 = vld [vmem:[#allocation5 + $0x30] sm:$0xff]
    %v98 = vld [vmem:[#allocation5 + $0x38] sm:$0xff]
    %v99 = vld [vmem:[#allocation5 + $0x40] sm:$0xff]
    %v100 = vld [vmem:[#allocation5 + $0x48] sm:$0xff]
    %v101 = vld [vmem:[#allocation5 + $0x50] sm:$0xff]
    %v102 = vld [vmem:[#allocation5 + $0x58] sm:$0xff]
    %v103 = vld [vmem:[#allocation5 + $0x60] sm:$0xff]
    %v104 = vld [vmem:[#allocation5 + $0x68] sm:$0xff]
    %v105 = vld [vmem:[#allocation5 + $0x70] sm:$0xff]
    %v106 = vld [vmem:[#allocation5 + $0x78] sm:$0xff]
    %v107 = vld [vmem:[#allocation5 + $0x80] sm:$0xff]
    %v108 = vld [vmem:[#allocation5 + $0x88] sm:$0xff]
    %v109 = vld [vmem:[#allocation5 + $0x90] sm:$0xff]
    %v110 = vld [vmem:[#allocation5 + $0x98] sm:$0xff]
    %v111 = vld [vmem:[#allocation5 + $0xa0] sm:$0xff]
    %v112 = vld [vmem:[#allocation5 + $0xa8] sm:$0xff]
    %v113 = vld [vmem:[#allocation5 + $0xb0] sm:$0xff]
    %v114 = vld [vmem:[#allocation5 + $0xb8] sm:$0xff]
    %v115 = vld [vmem:[#allocation5 + $0xc0] sm:$0xff]
    %v116 = vld [vmem:[#allocation5 + $0xc8] sm:$0xff]
    %v117 = vld [vmem:[#allocation5 + $0xd0] sm:$0xff]
    %v118 = vld [vmem:[#allocation5 + $0xd8] sm:$0xff]
    %v119 = vld [vmem:[#allocation5 + $0xe0] sm:$0xff]
    %v120 = vld [vmem:[#allocation5 + $0xe8] sm:$0xff]
    %v121 = vld [vmem:[#allocation5 + $0xf0] sm:$0xff]
    %v122 = vld [vmem:[#allocation5 + $0xf8] sm:$0xff]
    %v123 = vld [vmem:[#allocation5 + $0x100] sm:$0xff]
    %v124 = vld [vmem:[#allocation5 + $0x108] sm:$0xff]
    %v125 = vld [vmem:[#allocation5 + $0x110] sm:$0xff]
    %v126 = vld [vmem:[#allocation5 + $0x118] sm:$0xff]
    %v127 = vld [vmem:[#allocation5 + $0x120] sm:$0xff]
    %v128 = vld [vmem:[#allocation5 + $0x128] sm:$0xff]
    %v129 = vld [vmem:[#allocation5 + $0x130] sm:$0xff]
    %v130 = vld [vmem:[#allocation5 + $0x138] sm:$0xff]
    %v131 = vld [vmem:[#allocation5 + $0x140] sm:$0xff]
    %v132 = vld [vmem:[#allocation5 + $0x148] sm:$0xff]
    %v133 = vld [vmem:[#allocation5 + $0x150] sm:$0xff]
    %v134 = vld [vmem:[#allocation5 + $0x158] sm:$0xff]
    %v135 = vld [vmem:[#allocation5 + $0x160] sm:$0xff]
    %v136 = vld [vmem:[#allocation5 + $0x168] sm:$0xff]
    %v137 = vld [vmem:[#allocation5 + $0x170] sm:$0xff]
    %v138 = vld [vmem:[#allocation5 + $0x178] sm:$0xff]
    %v139 = vld [vmem:[#allocation5 + $0x180] sm:$0xff]
    %v140 = vld [vmem:[#allocation5 + $0x188] sm:$0xff]
    %v141 = vld [vmem:[#allocation5 + $0x190] sm:$0xff]
    %v142 = vld [vmem:[#allocation5 + $0x198] sm:$0xff]
    %v143 = vld [vmem:[#allocation5 + $0x1a0] sm:$0xff]
    %v144 = vld [vmem:[#allocation5 + $0x1a8] sm:$0xff]
    %v145 = vld [vmem:[#allocation5 + $0x1b0] sm:$0xff]
    %v146 = vld [vmem:[#allocation5 + $0x1b8] sm:$0xff]
    %v147 = vld [vmem:[#allocation5 + $0x1c0] sm:$0xff]
    %v148 = vld [vmem:[#allocation5 + $0x1c8] sm:$0xff]
    %v149 = vld [vmem:[#allocation5 + $0x1d0] sm:$0xff]
    %v150 = vld [vmem:[#allocation5 + $0x1d8] sm:$0xff]
    %v151 = vld [vmem:[#allocation5 + $0x1e0] sm:$0xff]
    %v152 = vld [vmem:[#allocation5 + $0x1e8] sm:$0xff]
    %v153 = vld [vmem:[#allocation5 + $0x1f0] sm:$0xff]
    %v154 = vld [vmem:[#allocation5 + $0x1f8] sm:$0xff]
    %v155 = vld [vmem:[#allocation5 + $0x200] sm:$0xff]
    %v156 = vld [vmem:[#allocation5 + $0x208] sm:$0xff]
    %v157 = vld [vmem:[#allocation5 + $0x210] sm:$0xff]
    %v158 = vld [vmem:[#allocation5 + $0x218] sm:$0xff]
    %v159 = vld [vmem:[#allocation5 + $0x220] sm:$0xff]
    %v160 = vld [vmem:[#allocation5 + $0x228] sm:$0xff]
    %v161 = vld [vmem:[#allocation5 + $0x230] sm:$0xff]
    %v162 = vld [vmem:[#allocation5 + $0x238] sm:$0xff]
    %v163 = vld [vmem:[#allocation5 + $0x240] sm:$0xff]
    %v164 = vld [vmem:[#allocation5 + $0x248] sm:$0xff]
    %v165 = vld [vmem:[#allocation5 + $0x250] sm:$0xff]
    %v166 = vld [vmem:[#allocation5 + $0x258] sm:$0xff]
    %v167 = vld [vmem:[#allocation5 + $0x260] sm:$0xff]
    %v168 = vld [vmem:[#allocation5 + $0x268] sm:$0xff]
    %v169 = vld [vmem:[#allocation5 + $0x270] sm:$0xff]
    %v170 = vld [vmem:[#allocation5 + $0x278] sm:$0xff]
    %v171 = vld [vmem:[#allocation5 + $0x280] sm:$0xff]
    %v172 = vld [vmem:[#allocation5 + $0x288] sm:$0xff]
    %v173 = vld [vmem:[#allocation5 + $0x290] sm:$0xff]
    %v174 = vld [vmem:[#allocation5 + $0x298] sm:$0xff]
    %v175 = vld [vmem:[#allocation5 + $0x2a0] sm:$0xff]
    %v176 = vld [vmem:[#allocation5 + $0x2a8] sm:$0xff]
    %v177 = vld [vmem:[#allocation5 + $0x2b0] sm:$0xff]
    %v178 = vld [vmem:[#allocation5 + $0x2b8] sm:$0xff]
    %v179 = vld [vmem:[#allocation5 + $0x2c0] sm:$0xff]
    %v180 = vld [vmem:[#allocation5 + $0x2c8] sm:$0xff]
    %v181 = vld [vmem:[#allocation5 + $0x2d0] sm:$0xff]
    %v182 = vld [vmem:[#allocation5 + $0x2d8] sm:$0xff]
    %v183 = vld [vmem:[#allocation5 + $0x2e0] sm:$0xff]
    %v184 = vld [vmem:[#allocation5 + $0x2e8] sm:$0xff]
    %v185 = vld [vmem:[#allocation5 + $0x2f0] sm:$0xff]
    %v186 = vld [vmem:[#allocation5 + $0x2f8] sm:$0xff]
    %v187 = vld [vmem:[#allocation5 + $0x300] sm:$0xff]
    %v188 = vld [vmem:[#allocation5 + $0x308] sm:$0xff]
    %v189 = vld [vmem:[#allocation5 + $0x310] sm:$0xff]
    %v190 = vld [vmem:[#allocation5 + $0x318] sm:$0xff]
    %v191 = vld [vmem:[#allocation5 + $0x320] sm:$0xff]
    %v192 = vld [vmem:[#allocation5 + $0x328] sm:$0xff]
    %v193 = vld [vmem:[#allocation5 + $0x330] sm:$0xff]
    %v194 = vld [vmem:[#allocation5 + $0x338] sm:$0xff]
    %v195 = vld [vmem:[#allocation5 + $0x340] sm:$0xff]
    %v196 = vld [vmem:[#allocation5 + $0x348] sm:$0xff]
    %v197 = vld [vmem:[#allocation5 + $0x350] sm:$0xff]
    %v198 = vld [vmem:[#allocation5 + $0x358] sm:$0xff]
    %v199 = vld [vmem:[#allocation5 + $0x360] sm:$0xff]
    %v200 = vld [vmem:[#allocation5 + $0x368] sm:$0xff]
    %v201 = vld [vmem:[#allocation5 + $0x370] sm:$0xff]
    %v202 = vld [vmem:[#allocation5 + $0x378] sm:$0xff]
    %v203 = vld [vmem:[#allocation5 + $0x380] sm:$0xff]
    %v204 = vld [vmem:[#allocation5 + $0x388] sm:$0xff]
    %v205 = vld [vmem:[#allocation5 + $0x390] sm:$0xff]
    %v206 = vld [vmem:[#allocation5 + $0x398] sm:$0xff]
    %v207 = vld [vmem:[#allocation5 + $0x3a0] sm:$0xff]
    %v208 = vld [vmem:[#allocation5 + $0x3a8] sm:$0xff]
    %v209 = vld [vmem:[#allocation5 + $0x3b0] sm:$0xff]
    %v210 = vld [vmem:[#allocation5 + $0x3b8] sm:$0xff]
    %v211 = vld [vmem:[#allocation5 + $0x3c0] sm:$0xff]
    %v212 = vld [vmem:[#allocation5 + $0x3c8] sm:$0xff]
    %v213 = vld [vmem:[#allocation5 + $0x3d0] sm:$0xff]
    %v214 = vld [vmem:[#allocation5 + $0x3d8] sm:$0xff]
    %v215 = vld [vmem:[#allocation5 + $0x3e0] sm:$0xff]
    %v216 = vld [vmem:[#allocation5 + $0x3e8] sm:$0xff]
    %v217 = vld [vmem:[#allocation5 + $0x3f0] sm:$0xff]
    %v218 = vld [vmem:[#allocation5 + $0x3f8] sm:$0xff]
    %v219 = vld [vmem:[#allocation5 + $0x400] sm:$0xff]
    %v220 = vld [vmem:[#allocation5 + $0x408] sm:$0xff]
    %v221 = vld [vmem:[#allocation5 + $0x410] sm:$0xff]
    %v222 = vld [vmem:[#allocation5 + $0x418] sm:$0xff]
    %v223 = vld [vmem:[#allocation5 + $0x420] sm:$0xff]
    %v224 = vld [vmem:[#allocation5 + $0x428] sm:$0xff]
    %v225 = vld [vmem:[#allocation5 + $0x430] sm:$0xff]
    %v226 = vld [vmem:[#allocation5 + $0x438] sm:$0xff]
    %v227 = vld [vmem:[#allocation5 + $0x440] sm:$0xff]
    %v228 = vld [vmem:[#allocation5 + $0x448] sm:$0xff]
    %v229 = vld [vmem:[#allocation5 + $0x450] sm:$0xff]
    %v230 = vld [vmem:[#allocation5 + $0x458] sm:$0xff]
    %v231 = vld [vmem:[#allocation5 + $0x460] sm:$0xff]
    %v232 = vld [vmem:[#allocation5 + $0x468] sm:$0xff]
    %v233 = vld [vmem:[#allocation5 + $0x470] sm:$0xff]
    %v234 = vld [vmem:[#allocation5 + $0x478] sm:$0xff]
    %v235 = vld [vmem:[#allocation5 + $0x480] sm:$0xff]
    %v236 = vld [vmem:[#allocation5 + $0x488] sm:$0xff]
    %v237 = vld [vmem:[#allocation5 + $0x490] sm:$0xff]
    %v238 = vld [vmem:[#allocation5 + $0x498] sm:$0xff]
    %v239 = vld [vmem:[#allocation5 + $0x4a0] sm:$0xff]
    %v240 = vld [vmem:[#allocation5 + $0x4a8] sm:$0xff]
    %v241 = vld [vmem:[#allocation5 + $0x4b0] sm:$0xff]
    %v242 = vld [vmem:[#allocation5 + $0x4b8] sm:$0xff]
    %v243 = vld [vmem:[#allocation5 + $0x4c0] sm:$0xff]
    %v244 = vld [vmem:[#allocation5 + $0x4c8] sm:$0xff]
    %v245 = vld [vmem:[#allocation5 + $0x4d0] sm:$0xff]
    %v246 = vld [vmem:[#allocation5 + $0x4d8] sm:$0xff]
    %v247 = vld [vmem:[#allocation5 + $0x4e0] sm:$0xff]
    %v248 = vld [vmem:[#allocation5 + $0x4e8] sm:$0xff]
    %v249 = vld [vmem:[#allocation5 + $0x4f0] sm:$0xff]
    %v250 = vld [vmem:[#allocation5 + $0x4f8] sm:$0xff]
    %v251 = vld [vmem:[#allocation5 + $0x500] sm:$0xff]
    %v252 = vld [vmem:[#allocation5 + $0x508] sm:$0xff]
    %v253 = vld [vmem:[#allocation5 + $0x510] sm:$0xff]
    %v254 = vld [vmem:[#allocation5 + $0x518] sm:$0xff]
    %v255 = vld [vmem:[#allocation5 + $0x520] sm:$0xff]
    %v256 = vld [vmem:[#allocation5 + $0x528] sm:$0xff]
    %v257 = vld [vmem:[#allocation5 + $0x530] sm:$0xff]
    %v258 = vld [vmem:[#allocation5 + $0x538] sm:$0xff]
    %v259 = vld [vmem:[#allocation5 + $0x540] sm:$0xff]
    %v260 = vld [vmem:[#allocation5 + $0x548] sm:$0xff]
    %v261 = vld [vmem:[#allocation5 + $0x550] sm:$0xff]
    %v262 = vld [vmem:[#allocation5 + $0x558] sm:$0xff]
    %v263 = vld [vmem:[#allocation5 + $0x560] sm:$0xff]
    %v264 = vld [vmem:[#allocation5 + $0x568] sm:$0xff]
    %v265 = vld [vmem:[#allocation5 + $0x570] sm:$0xff]
    %v266 = vld [vmem:[#allocation5 + $0x578] sm:$0xff]
    %v267 = vld [vmem:[#allocation5 + $0x580] sm:$0xff]
    %v268 = vld [vmem:[#allocation5 + $0x588] sm:$0xff]
    %v269 = vld [vmem:[#allocation5 + $0x590] sm:$0xff]
    %v270 = vld [vmem:[#allocation5 + $0x598] sm:$0xff]
    %v271 = vld [vmem:[#allocation5 + $0x5a0] sm:$0xff]
    %v272 = vld [vmem:[#allocation5 + $0x5a8] sm:$0xff]
    %v273 = vld [vmem:[#allocation5 + $0x5b0] sm:$0xff]
    %v274 = vld [vmem:[#allocation5 + $0x5b8] sm:$0xff]
    %v275 = vld [vmem:[#allocation5 + $0x5c0] sm:$0xff]
    %v276 = vld [vmem:[#allocation5 + $0x5c8] sm:$0xff]
    %v277 = vld [vmem:[#allocation5 + $0x5d0] sm:$0xff]
    %v278 = vld [vmem:[#allocation5 + $0x5d8] sm:$0xff]
    %v279 = vld [vmem:[#allocation5 + $0x5e0] sm:$0xff]
    %v280 = vld [vmem:[#allocation5 + $0x5e8] sm:$0xff]
    %v281 = vld [vmem:[#allocation5 + $0x5f0] sm:$0xff]
    %v282 = vld [vmem:[#allocation5 + $0x5f8] sm:$0xff]
    %v283 = vld [vmem:[#allocation5 + $0x600] sm:$0xff]
    %v284 = vld [vmem:[#allocation5 + $0x608] sm:$0xff]
    %v285 = vld [vmem:[#allocation5 + $0x610] sm:$0xff]
    %v286 = vld [vmem:[#allocation5 + $0x618] sm:$0xff]
    %v287 = vld [vmem:[#allocation5 + $0x620] sm:$0xff]
    %v288 = vld [vmem:[#allocation5 + $0x628] sm:$0xff]
    %v289 = vld [vmem:[#allocation5 + $0x630] sm:$0xff]
    %v290 = vld [vmem:[#allocation5 + $0x638] sm:$0xff]
    %v291 = vld [vmem:[#allocation5 + $0x640] sm:$0xff]
    %v292 = vld [vmem:[#allocation5 + $0x648] sm:$0xff]
    %v293 = vld [vmem:[#allocation5 + $0x650] sm:$0xff]
    %v294 = vld [vmem:[#allocation5 + $0x658] sm:$0xff]
    %v295 = vld [vmem:[#allocation5 + $0x660] sm:$0xff]
    %v296 = vld [vmem:[#allocation5 + $0x668] sm:$0xff]
    %v297 = vld [vmem:[#allocation5 + $0x670] sm:$0xff]
    %v298 = vld [vmem:[#allocation5 + $0x678] sm:$0xff]
    %v299 = vld [vmem:[#allocation5 + $0x680] sm:$0xff]
    %v300 = vld [vmem:[#allocation5 + $0x688] sm:$0xff]
    %v301 = vld [vmem:[#allocation5 + $0x690] sm:$0xff]
    %v302 = vld [vmem:[#allocation5 + $0x698] sm:$0xff]
    %v303 = vld [vmem:[#allocation5 + $0x6a0] sm:$0xff]
    %v304 = vld [vmem:[#allocation5 + $0x6a8] sm:$0xff]
    %v305 = vld [vmem:[#allocation5 + $0x6b0] sm:$0xff]
    %v306 = vld [vmem:[#allocation5 + $0x6b8] sm:$0xff]
    %v307 = vld [vmem:[#allocation5 + $0x6c0] sm:$0xff]
    %v308 = vld [vmem:[#allocation5 + $0x6c8] sm:$0xff]
    %v309 = vld [vmem:[#allocation5 + $0x6d0] sm:$0xff]
    %v310 = vld [vmem:[#allocation5 + $0x6d8] sm:$0xff]
    %v311 = vld [vmem:[#allocation5 + $0x6e0] sm:$0xff]
    %v312 = vld [vmem:[#allocation5 + $0x6e8] sm:$0xff]
    %v313 = vld [vmem:[#allocation5 + $0x6f0] sm:$0xff]
    %v314 = vld [vmem:[#allocation5 + $0x6f8] sm:$0xff]
    %v315 = vld [vmem:[#allocation5 + $0x700] sm:$0xff]
    %v316 = vld [vmem:[#allocation5 + $0x708] sm:$0xff]
    %v317 = vld [vmem:[#allocation5 + $0x710] sm:$0xff]
    %v318 = vld [vmem:[#allocation5 + $0x718] sm:$0xff]
    %v319 = vld [vmem:[#allocation5 + $0x720] sm:$0xff]
    %v320 = vld [vmem:[#allocation5 + $0x728] sm:$0xff]
    %v321 = vld [vmem:[#allocation5 + $0x730] sm:$0xff]
    %v322 = vld [vmem:[#allocation5 + $0x738] sm:$0xff]
    %v323 = vld [vmem:[#allocation5 + $0x740] sm:$0xff]
    %v324 = vld [vmem:[#allocation5 + $0x748] sm:$0xff]
    %v325 = vld [vmem:[#allocation5 + $0x750] sm:$0xff]
    %v326 = vld [vmem:[#allocation5 + $0x758] sm:$0xff]
    %v327 = vld [vmem:[#allocation5 + $0x760] sm:$0xff]
    %v328 = vld [vmem:[#allocation5 + $0x768] sm:$0xff]
    %v329 = vld [vmem:[#allocation5 + $0x770] sm:$0xff]
    %v330 = vld [vmem:[#allocation5 + $0x778] sm:$0xff]
    %v331 = vld [vmem:[#allocation5 + $0x780] sm:$0xff]
    %v332 = vld [vmem:[#allocation5 + $0x788] sm:$0xff]
    %v333 = vld [vmem:[#allocation5 + $0x790] sm:$0xff]
    %v334 = vld [vmem:[#allocation5 + $0x798] sm:$0xff]
    %v335 = vld [vmem:[#allocation5 + $0x7a0] sm:$0xff]
    %v336 = vld [vmem:[#allocation5 + $0x7a8] sm:$0xff]
    %v337 = vld [vmem:[#allocation5 + $0x7b0] sm:$0xff]
    %v338 = vld [vmem:[#allocation5 + $0x7b8] sm:$0xff]
    %v339 = vld [vmem:[#allocation5 + $0x7c0] sm:$0xff]
    %v340 = vld [vmem:[#allocation5 + $0x7c8] sm:$0xff]
    %v341 = vld [vmem:[#allocation5 + $0x7d0] sm:$0xff]
    %v342 = vld [vmem:[#allocation5 + $0x7d8] sm:$0xff]
    %v343 = vld [vmem:[#allocation5 + $0x7e0] sm:$0xff]
    %v344 = vld [vmem:[#allocation5 + $0x7e8] sm:$0xff]
    %v345 = vld [vmem:[#allocation5 + $0x7f0] sm:$0xff]
    %v346 = vld [vmem:[#allocation5 + $0x7f8] sm:$0xff]
    %v347 = vld [vmem:[%s2] sm:$0xf]
    %v349 = vlaneseq
    %v350 = vshrl.u32 %v349, 7
    %v351 = vsub.s32 0, %v350
    %v352 = vrot.slane %v347, %v351
    %v353 = vlaneseq
    %v354 = vshrl.u32 %v353, 7
    %v355 = vsub.s32 1, %v354
    %v356 = vrot.slane %v347, %v355
    %v357 = vlaneseq
    %v358 = vshrl.u32 %v357, 7
    %v359 = vsub.s32 2, %v358
    %v360 = vrot.slane %v347, %v359
    %v361 = vlaneseq
    %v362 = vshrl.u32 %v361, 7
    %v363 = vsub.s32 3, %v362
    %v364 = vrot.slane %v347, %v363
    %v377 = vunpack.c.l.b16 %v83
    %v378 = vunpack.c.h.b16 %v83
    %v379 = vunpack.c.l.b16 %v84
    %v380 = vunpack.c.h.b16 %v84
    %v381 = vunpack.c.l.b16 %v85
    %v382 = vunpack.c.h.b16 %v85
    %v383 = vunpack.c.l.b16 %v86
    %v384 = vunpack.c.h.b16 %v86
    %v385 = vunpack.c.l.b16 %v87
    %v386 = vunpack.c.h.b16 %v87
    %v387 = vunpack.c.l.b16 %v88
    %v388 = vunpack.c.h.b16 %v88
    %v389 = vunpack.c.l.b16 %v89
    %v390 = vunpack.c.h.b16 %v89
    %v391 = vunpack.c.l.b16 %v90
    %v392 = vunpack.c.h.b16 %v90
    %v393 = vpack.c.b16 %v385, %v377
    %v394 = vpack.c.b16 %v386, %v378
    %v395 = vpack.c.b16 %v387, %v379
    %v396 = vpack.c.b16 %v388, %v380
    %v397 = vpack.c.b16 %v389, %v381
    %v398 = vpack.c.b16 %v390, %v382
    %v399 = vpack.c.b16 %v391, %v383
    %v400 = vpack.c.b16 %v392, %v384
    %v665 = vunpack.c.l.b16 %v91
    %v666 = vunpack.c.h.b16 %v91
    %v667 = vunpack.c.l.b16 %v92
    %v668 = vunpack.c.h.b16 %v92
    %v669 = vunpack.c.l.b16 %v93
    %v670 = vunpack.c.h.b16 %v93
    %v671 = vunpack.c.l.b16 %v94
    %v672 = vunpack.c.h.b16 %v94
    %v673 = vunpack.c.l.b16 %v95
    %v674 = vunpack.c.h.b16 %v95
    %v675 = vunpack.c.l.b16 %v96
    %v676 = vunpack.c.h.b16 %v96
    %v677 = vunpack.c.l.b16 %v97
    %v678 = vunpack.c.h.b16 %v97
    %v679 = vunpack.c.l.b16 %v98
    %v680 = vunpack.c.h.b16 %v98
    %v681 = vunpack.c.l.b16 %v99
    %v682 = vunpack.c.h.b16 %v99
    %v683 = vunpack.c.l.b16 %v100
    %v684 = vunpack.c.h.b16 %v100
    %v685 = vunpack.c.l.b16 %v101
    %v686 = vunpack.c.h.b16 %v101
    %v687 = vunpack.c.l.b16 %v102
    %v688 = vunpack.c.h.b16 %v102
    %v689 = vunpack.c.l.b16 %v103
    %v690 = vunpack.c.h.b16 %v103
    %v691 = vunpack.c.l.b16 %v104
    %v692 = vunpack.c.h.b16 %v104
    %v693 = vunpack.c.l.b16 %v105
    %v694 = vunpack.c.h.b16 %v105
    %v695 = vunpack.c.l.b16 %v106
    %v696 = vunpack.c.h.b16 %v106
    %v697 = vunpack.c.l.b16 %v107
    %v698 = vunpack.c.h.b16 %v107
    %v699 = vunpack.c.l.b16 %v108
    %v700 = vunpack.c.h.b16 %v108
    %v701 = vunpack.c.l.b16 %v109
    %v702 = vunpack.c.h.b16 %v109
    %v703 = vunpack.c.l.b16 %v110
    %v704 = vunpack.c.h.b16 %v110
    %v705 = vunpack.c.l.b16 %v111
    %v706 = vunpack.c.h.b16 %v111
    %v707 = vunpack.c.l.b16 %v112
    %v708 = vunpack.c.h.b16 %v112
    %v709 = vunpack.c.l.b16 %v113
    %v710 = vunpack.c.h.b16 %v113
    %v711 = vunpack.c.l.b16 %v114
    %v712 = vunpack.c.h.b16 %v114
    %v713 = vunpack.c.l.b16 %v115
    %v714 = vunpack.c.h.b16 %v115
    %v715 = vunpack.c.l.b16 %v116
    %v716 = vunpack.c.h.b16 %v116
    %v717 = vunpack.c.l.b16 %v117
    %v718 = vunpack.c.h.b16 %v117
    %v719 = vunpack.c.l.b16 %v118
    %v720 = vunpack.c.h.b16 %v118
    %v721 = vunpack.c.l.b16 %v119
    %v722 = vunpack.c.h.b16 %v119
    %v723 = vunpack.c.l.b16 %v120
    %v724 = vunpack.c.h.b16 %v120
    %v725 = vunpack.c.l.b16 %v121
    %v726 = vunpack.c.h.b16 %v121
    %v727 = vunpack.c.l.b16 %v122
    %v728 = vunpack.c.h.b16 %v122
    %v729 = vunpack.c.l.b16 %v123
    %v730 = vunpack.c.h.b16 %v123
    %v731 = vunpack.c.l.b16 %v124
    %v732 = vunpack.c.h.b16 %v124
    %v733 = vunpack.c.l.b16 %v125
    %v734 = vunpack.c.h.b16 %v125
    %v735 = vunpack.c.l.b16 %v126
    %v736 = vunpack.c.h.b16 %v126
    %v737 = vunpack.c.l.b16 %v127
    %v738 = vunpack.c.h.b16 %v127
    %v739 = vunpack.c.l.b16 %v128
    %v740 = vunpack.c.h.b16 %v128
    %v741 = vunpack.c.l.b16 %v129
    %v742 = vunpack.c.h.b16 %v129
    %v743 = vunpack.c.l.b16 %v130
    %v744 = vunpack.c.h.b16 %v130
    %v745 = vunpack.c.l.b16 %v131
    %v746 = vunpack.c.h.b16 %v131
    %v747 = vunpack.c.l.b16 %v132
    %v748 = vunpack.c.h.b16 %v132
    %v749 = vunpack.c.l.b16 %v133
    %v750 = vunpack.c.h.b16 %v133
    %v751 = vunpack.c.l.b16 %v134
    %v752 = vunpack.c.h.b16 %v134
    %v753 = vunpack.c.l.b16 %v135
    %v754 = vunpack.c.h.b16 %v135
    %v755 = vunpack.c.l.b16 %v136
    %v756 = vunpack.c.h.b16 %v136
    %v757 = vunpack.c.l.b16 %v137
    %v758 = vunpack.c.h.b16 %v137
    %v759 = vunpack.c.l.b16 %v138
    %v760 = vunpack.c.h.b16 %v138
    %v761 = vunpack.c.l.b16 %v139
    %v762 = vunpack.c.h.b16 %v139
    %v763 = vunpack.c.l.b16 %v140
    %v764 = vunpack.c.h.b16 %v140
    %v765 = vunpack.c.l.b16 %v141
    %v766 = vunpack.c.h.b16 %v141
    %v767 = vunpack.c.l.b16 %v142
    %v768 = vunpack.c.h.b16 %v142
    %v769 = vunpack.c.l.b16 %v143
    %v770 = vunpack.c.h.b16 %v143
    %v771 = vunpack.c.l.b16 %v144
    %v772 = vunpack.c.h.b16 %v144
    %v773 = vunpack.c.l.b16 %v145
    %v774 = vunpack.c.h.b16 %v145
    %v775 = vunpack.c.l.b16 %v146
    %v776 = vunpack.c.h.b16 %v146
    %v777 = vunpack.c.l.b16 %v147
    %v778 = vunpack.c.h.b16 %v147
    %v779 = vunpack.c.l.b16 %v148
    %v780 = vunpack.c.h.b16 %v148
    %v781 = vunpack.c.l.b16 %v149
    %v782 = vunpack.c.h.b16 %v149
    %v783 = vunpack.c.l.b16 %v150
    %v784 = vunpack.c.h.b16 %v150
    %v785 = vunpack.c.l.b16 %v151
    %v786 = vunpack.c.h.b16 %v151
    %v787 = vunpack.c.l.b16 %v152
    %v788 = vunpack.c.h.b16 %v152
    %v789 = vunpack.c.l.b16 %v153
    %v790 = vunpack.c.h.b16 %v153
    %v791 = vunpack.c.l.b16 %v154
    %v792 = vunpack.c.h.b16 %v154
    %v793 = vunpack.c.l.b16 %v155
    %v794 = vunpack.c.h.b16 %v155
    %v795 = vunpack.c.l.b16 %v156
    %v796 = vunpack.c.h.b16 %v156
    %v797 = vunpack.c.l.b16 %v157
    %v798 = vunpack.c.h.b16 %v157
    %v799 = vunpack.c.l.b16 %v158
    %v800 = vunpack.c.h.b16 %v158
    %v801 = vunpack.c.l.b16 %v159
    %v802 = vunpack.c.h.b16 %v159
    %v803 = vunpack.c.l.b16 %v160
    %v804 = vunpack.c.h.b16 %v160
    %v805 = vunpack.c.l.b16 %v161
    %v806 = vunpack.c.h.b16 %v161
    %v807 = vunpack.c.l.b16 %v162
    %v808 = vunpack.c.h.b16 %v162
    %v809 = vunpack.c.l.b16 %v163
    %v810 = vunpack.c.h.b16 %v163
    %v811 = vunpack.c.l.b16 %v164
    %v812 = vunpack.c.h.b16 %v164
    %v813 = vunpack.c.l.b16 %v165
    %v814 = vunpack.c.h.b16 %v165
    %v815 = vunpack.c.l.b16 %v166
    %v816 = vunpack.c.h.b16 %v166
    %v817 = vunpack.c.l.b16 %v167
    %v818 = vunpack.c.h.b16 %v167
    %v819 = vunpack.c.l.b16 %v168
    %v820 = vunpack.c.h.b16 %v168
    %v821 = vunpack.c.l.b16 %v169
    %v822 = vunpack.c.h.b16 %v169
    %v823 = vunpack.c.l.b16 %v170
    %v824 = vunpack.c.h.b16 %v170
    %v825 = vunpack.c.l.b16 %v171
    %v826 = vunpack.c.h.b16 %v171
    %v827 = vunpack.c.l.b16 %v172
    %v828 = vunpack.c.h.b16 %v172
    %v829 = vunpack.c.l.b16 %v173
    %v830 = vunpack.c.h.b16 %v173
    %v831 = vunpack.c.l.b16 %v174
    %v832 = vunpack.c.h.b16 %v174
    %v833 = vunpack.c.l.b16 %v175
    %v834 = vunpack.c.h.b16 %v175
    %v835 = vunpack.c.l.b16 %v176
    %v836 = vunpack.c.h.b16 %v176
    %v837 = vunpack.c.l.b16 %v177
    %v838 = vunpack.c.h.b16 %v177
    %v839 = vunpack.c.l.b16 %v178
    %v840 = vunpack.c.h.b16 %v178
    %v841 = vunpack.c.l.b16 %v179
    %v842 = vunpack.c.h.b16 %v179
    %v843 = vunpack.c.l.b16 %v180
    %v844 = vunpack.c.h.b16 %v180
    %v845 = vunpack.c.l.b16 %v181
    %v846 = vunpack.c.h.b16 %v181
    %v847 = vunpack.c.l.b16 %v182
    %v848 = vunpack.c.h.b16 %v182
    %v849 = vunpack.c.l.b16 %v183
    %v850 = vunpack.c.h.b16 %v183
    %v851 = vunpack.c.l.b16 %v184
    %v852 = vunpack.c.h.b16 %v184
    %v853 = vunpack.c.l.b16 %v185
    %v854 = vunpack.c.h.b16 %v185
    %v855 = vunpack.c.l.b16 %v186
    %v856 = vunpack.c.h.b16 %v186
    %v857 = vunpack.c.l.b16 %v187
    %v858 = vunpack.c.h.b16 %v187
    %v859 = vunpack.c.l.b16 %v188
    %v860 = vunpack.c.h.b16 %v188
    %v861 = vunpack.c.l.b16 %v189
    %v862 = vunpack.c.h.b16 %v189
    %v863 = vunpack.c.l.b16 %v190
    %v864 = vunpack.c.h.b16 %v190
    %v865 = vunpack.c.l.b16 %v191
    %v866 = vunpack.c.h.b16 %v191
    %v867 = vunpack.c.l.b16 %v192
    %v868 = vunpack.c.h.b16 %v192
    %v869 = vunpack.c.l.b16 %v193
    %v870 = vunpack.c.h.b16 %v193
    %v871 = vunpack.c.l.b16 %v194
    %v872 = vunpack.c.h.b16 %v194
    %v873 = vunpack.c.l.b16 %v195
    %v874 = vunpack.c.h.b16 %v195
    %v875 = vunpack.c.l.b16 %v196
    %v876 = vunpack.c.h.b16 %v196
    %v877 = vunpack.c.l.b16 %v197
    %v878 = vunpack.c.h.b16 %v197
    %v879 = vunpack.c.l.b16 %v198
    %v880 = vunpack.c.h.b16 %v198
    %v881 = vunpack.c.l.b16 %v199
    %v882 = vunpack.c.h.b16 %v199
    %v883 = vunpack.c.l.b16 %v200
    %v884 = vunpack.c.h.b16 %v200
    %v885 = vunpack.c.l.b16 %v201
    %v886 = vunpack.c.h.b16 %v201
    %v887 = vunpack.c.l.b16 %v202
    %v888 = vunpack.c.h.b16 %v202
    %v889 = vunpack.c.l.b16 %v203
    %v890 = vunpack.c.h.b16 %v203
    %v891 = vunpack.c.l.b16 %v204
    %v892 = vunpack.c.h.b16 %v204
    %v893 = vunpack.c.l.b16 %v205
    %v894 = vunpack.c.h.b16 %v205
    %v895 = vunpack.c.l.b16 %v206
    %v896 = vunpack.c.h.b16 %v206
    %v897 = vunpack.c.l.b16 %v207
    %v898 = vunpack.c.h.b16 %v207
    %v899 = vunpack.c.l.b16 %v208
    %v900 = vunpack.c.h.b16 %v208
    %v901 = vunpack.c.l.b16 %v209
    %v902 = vunpack.c.h.b16 %v209
    %v903 = vunpack.c.l.b16 %v210
    %v904 = vunpack.c.h.b16 %v210
    %v905 = vunpack.c.l.b16 %v211
    %v906 = vunpack.c.h.b16 %v211
    %v907 = vunpack.c.l.b16 %v212
    %v908 = vunpack.c.h.b16 %v212
    %v909 = vunpack.c.l.b16 %v213
    %v910 = vunpack.c.h.b16 %v213
    %v911 = vunpack.c.l.b16 %v214
    %v912 = vunpack.c.h.b16 %v214
    %v913 = vunpack.c.l.b16 %v215
    %v914 = vunpack.c.h.b16 %v215
    %v915 = vunpack.c.l.b16 %v216
    %v916 = vunpack.c.h.b16 %v216
    %v917 = vunpack.c.l.b16 %v217
    %v918 = vunpack.c.h.b16 %v217
    %v919 = vunpack.c.l.b16 %v218
    %v920 = vunpack.c.h.b16 %v218
    %v921 = vunpack.c.l.b16 %v219
    %v922 = vunpack.c.h.b16 %v219
    %v923 = vunpack.c.l.b16 %v220
    %v924 = vunpack.c.h.b16 %v220
    %v925 = vunpack.c.l.b16 %v221
    %v926 = vunpack.c.h.b16 %v221
    %v927 = vunpack.c.l.b16 %v222
    %v928 = vunpack.c.h.b16 %v222
    %v929 = vunpack.c.l.b16 %v223
    %v930 = vunpack.c.h.b16 %v223
    %v931 = vunpack.c.l.b16 %v224
    %v932 = vunpack.c.h.b16 %v224
    %v933 = vunpack.c.l.b16 %v225
    %v934 = vunpack.c.h.b16 %v225
    %v935 = vunpack.c.l.b16 %v226
    %v936 = vunpack.c.h.b16 %v226
    %v937 = vunpack.c.l.b16 %v227
    %v938 = vunpack.c.h.b16 %v227
    %v939 = vunpack.c.l.b16 %v228
    %v940 = vunpack.c.h.b16 %v228
    %v941 = vunpack.c.l.b16 %v229
    %v942 = vunpack.c.h.b16 %v229
    %v943 = vunpack.c.l.b16 %v230
    %v944 = vunpack.c.h.b16 %v230
    %v945 = vunpack.c.l.b16 %v231
    %v946 = vunpack.c.h.b16 %v231
    %v947 = vunpack.c.l.b16 %v232
    %v948 = vunpack.c.h.b16 %v232
    %v949 = vunpack.c.l.b16 %v233
    %v950 = vunpack.c.h.b16 %v233
    %v951 = vunpack.c.l.b16 %v234
    %v952 = vunpack.c.h.b16 %v234
    %v953 = vunpack.c.l.b16 %v235
    %v954 = vunpack.c.h.b16 %v235
    %v955 = vunpack.c.l.b16 %v236
    %v956 = vunpack.c.h.b16 %v236
    %v957 = vunpack.c.l.b16 %v237
    %v958 = vunpack.c.h.b16 %v237
    %v959 = vunpack.c.l.b16 %v238
    %v960 = vunpack.c.h.b16 %v238
    %v961 = vunpack.c.l.b16 %v239
    %v962 = vunpack.c.h.b16 %v239
    %v963 = vunpack.c.l.b16 %v240
    %v964 = vunpack.c.h.b16 %v240
    %v965 = vunpack.c.l.b16 %v241
    %v966 = vunpack.c.h.b16 %v241
    %v967 = vunpack.c.l.b16 %v242
    %v968 = vunpack.c.h.b16 %v242
    %v969 = vunpack.c.l.b16 %v243
    %v970 = vunpack.c.h.b16 %v243
    %v971 = vunpack.c.l.b16 %v244
    %v972 = vunpack.c.h.b16 %v244
    %v973 = vunpack.c.l.b16 %v245
    %v974 = vunpack.c.h.b16 %v245
    %v975 = vunpack.c.l.b16 %v246
    %v976 = vunpack.c.h.b16 %v246
    %v977 = vunpack.c.l.b16 %v247
    %v978 = vunpack.c.h.b16 %v247
    %v979 = vunpack.c.l.b16 %v248
    %v980 = vunpack.c.h.b16 %v248
    %v981 = vunpack.c.l.b16 %v249
    %v982 = vunpack.c.h.b16 %v249
    %v983 = vunpack.c.l.b16 %v250
    %v984 = vunpack.c.h.b16 %v250
    %v985 = vunpack.c.l.b16 %v251
    %v986 = vunpack.c.h.b16 %v251
    %v987 = vunpack.c.l.b16 %v252
    %v988 = vunpack.c.h.b16 %v252
    %v989 = vunpack.c.l.b16 %v253
    %v990 = vunpack.c.h.b16 %v253
    %v991 = vunpack.c.l.b16 %v254
    %v992 = vunpack.c.h.b16 %v254
    %v993 = vunpack.c.l.b16 %v255
    %v994 = vunpack.c.h.b16 %v255
    %v995 = vunpack.c.l.b16 %v256
    %v996 = vunpack.c.h.b16 %v256
    %v997 = vunpack.c.l.b16 %v257
    %v998 = vunpack.c.h.b16 %v257
    %v999 = vunpack.c.l.b16 %v258
    %v1000 = vunpack.c.h.b16 %v258
    %v1001 = vunpack.c.l.b16 %v259
    %v1002 = vunpack.c.h.b16 %v259
    %v1003 = vunpack.c.l.b16 %v260
    %v1004 = vunpack.c.h.b16 %v260
    %v1005 = vunpack.c.l.b16 %v261
    %v1006 = vunpack.c.h.b16 %v261
    %v1007 = vunpack.c.l.b16 %v262
    %v1008 = vunpack.c.h.b16 %v262
    %v1009 = vunpack.c.l.b16 %v263
    %v1010 = vunpack.c.h.b16 %v263
    %v1011 = vunpack.c.l.b16 %v264
    %v1012 = vunpack.c.h.b16 %v264
    %v1013 = vunpack.c.l.b16 %v265
    %v1014 = vunpack.c.h.b16 %v265
    %v1015 = vunpack.c.l.b16 %v266
    %v1016 = vunpack.c.h.b16 %v266
    %v1017 = vunpack.c.l.b16 %v267
    %v1018 = vunpack.c.h.b16 %v267
    %v1019 = vunpack.c.l.b16 %v268
    %v1020 = vunpack.c.h.b16 %v268
    %v1021 = vunpack.c.l.b16 %v269
    %v1022 = vunpack.c.h.b16 %v269
    %v1023 = vunpack.c.l.b16 %v270
    %v1024 = vunpack.c.h.b16 %v270
    %v1025 = vunpack.c.l.b16 %v271
    %v1026 = vunpack.c.h.b16 %v271
    %v1027 = vunpack.c.l.b16 %v272
    %v1028 = vunpack.c.h.b16 %v272
    %v1029 = vunpack.c.l.b16 %v273
    %v1030 = vunpack.c.h.b16 %v273
    %v1031 = vunpack.c.l.b16 %v274
    %v1032 = vunpack.c.h.b16 %v274
    %v1033 = vunpack.c.l.b16 %v275
    %v1034 = vunpack.c.h.b16 %v275
    %v1035 = vunpack.c.l.b16 %v276
    %v1036 = vunpack.c.h.b16 %v276
    %v1037 = vunpack.c.l.b16 %v277
    %v1038 = vunpack.c.h.b16 %v277
    %v1039 = vunpack.c.l.b16 %v278
    %v1040 = vunpack.c.h.b16 %v278
    %v1041 = vunpack.c.l.b16 %v279
    %v1042 = vunpack.c.h.b16 %v279
    %v1043 = vunpack.c.l.b16 %v280
    %v1044 = vunpack.c.h.b16 %v280
    %v1045 = vunpack.c.l.b16 %v281
    %v1046 = vunpack.c.h.b16 %v281
    %v1047 = vunpack.c.l.b16 %v282
    %v1048 = vunpack.c.h.b16 %v282
    %v1049 = vunpack.c.l.b16 %v283
    %v1050 = vunpack.c.h.b16 %v283
    %v1051 = vunpack.c.l.b16 %v284
    %v1052 = vunpack.c.h.b16 %v284
    %v1053 = vunpack.c.l.b16 %v285
    %v1054 = vunpack.c.h.b16 %v285
    %v1055 = vunpack.c.l.b16 %v286
    %v1056 = vunpack.c.h.b16 %v286
    %v1057 = vunpack.c.l.b16 %v287
    %v1058 = vunpack.c.h.b16 %v287
    %v1059 = vunpack.c.l.b16 %v288
    %v1060 = vunpack.c.h.b16 %v288
    %v1061 = vunpack.c.l.b16 %v289
    %v1062 = vunpack.c.h.b16 %v289
    %v1063 = vunpack.c.l.b16 %v290
    %v1064 = vunpack.c.h.b16 %v290
    %v1065 = vunpack.c.l.b16 %v291
    %v1066 = vunpack.c.h.b16 %v291
    %v1067 = vunpack.c.l.b16 %v292
    %v1068 = vunpack.c.h.b16 %v292
    %v1069 = vunpack.c.l.b16 %v293
    %v1070 = vunpack.c.h.b16 %v293
    %v1071 = vunpack.c.l.b16 %v294
    %v1072 = vunpack.c.h.b16 %v294
    %v1073 = vunpack.c.l.b16 %v295
    %v1074 = vunpack.c.h.b16 %v295
    %v1075 = vunpack.c.l.b16 %v296
    %v1076 = vunpack.c.h.b16 %v296
    %v1077 = vunpack.c.l.b16 %v297
    %v1078 = vunpack.c.h.b16 %v297
    %v1079 = vunpack.c.l.b16 %v298
    %v1080 = vunpack.c.h.b16 %v298
    %v1081 = vunpack.c.l.b16 %v299
    %v1082 = vunpack.c.h.b16 %v299
    %v1083 = vunpack.c.l.b16 %v300
    %v1084 = vunpack.c.h.b16 %v300
    %v1085 = vunpack.c.l.b16 %v301
    %v1086 = vunpack.c.h.b16 %v301
    %v1087 = vunpack.c.l.b16 %v302
    %v1088 = vunpack.c.h.b16 %v302
    %v1089 = vunpack.c.l.b16 %v303
    %v1090 = vunpack.c.h.b16 %v303
    %v1091 = vunpack.c.l.b16 %v304
    %v1092 = vunpack.c.h.b16 %v304
    %v1093 = vunpack.c.l.b16 %v305
    %v1094 = vunpack.c.h.b16 %v305
    %v1095 = vunpack.c.l.b16 %v306
    %v1096 = vunpack.c.h.b16 %v306
    %v1097 = vunpack.c.l.b16 %v307
    %v1098 = vunpack.c.h.b16 %v307
    %v1099 = vunpack.c.l.b16 %v308
    %v1100 = vunpack.c.h.b16 %v308
    %v1101 = vunpack.c.l.b16 %v309
    %v1102 = vunpack.c.h.b16 %v309
    %v1103 = vunpack.c.l.b16 %v310
    %v1104 = vunpack.c.h.b16 %v310
    %v1105 = vunpack.c.l.b16 %v311
    %v1106 = vunpack.c.h.b16 %v311
    %v1107 = vunpack.c.l.b16 %v312
    %v1108 = vunpack.c.h.b16 %v312
    %v1109 = vunpack.c.l.b16 %v313
    %v1110 = vunpack.c.h.b16 %v313
    %v1111 = vunpack.c.l.b16 %v314
    %v1112 = vunpack.c.h.b16 %v314
    %v1113 = vunpack.c.l.b16 %v315
    %v1114 = vunpack.c.h.b16 %v315
    %v1115 = vunpack.c.l.b16 %v316
    %v1116 = vunpack.c.h.b16 %v316
    %v1117 = vunpack.c.l.b16 %v317
    %v1118 = vunpack.c.h.b16 %v317
    %v1119 = vunpack.c.l.b16 %v318
    %v1120 = vunpack.c.h.b16 %v318
    %v1121 = vunpack.c.l.b16 %v319
    %v1122 = vunpack.c.h.b16 %v319
    %v1123 = vunpack.c.l.b16 %v320
    %v1124 = vunpack.c.h.b16 %v320
    %v1125 = vunpack.c.l.b16 %v321
    %v1126 = vunpack.c.h.b16 %v321
    %v1127 = vunpack.c.l.b16 %v322
    %v1128 = vunpack.c.h.b16 %v322
    %v1129 = vunpack.c.l.b16 %v323
    %v1130 = vunpack.c.h.b16 %v323
    %v1131 = vunpack.c.l.b16 %v324
    %v1132 = vunpack.c.h.b16 %v324
    %v1133 = vunpack.c.l.b16 %v325
    %v1134 = vunpack.c.h.b16 %v325
    %v1135 = vunpack.c.l.b16 %v326
    %v1136 = vunpack.c.h.b16 %v326
    %v1137 = vunpack.c.l.b16 %v327
    %v1138 = vunpack.c.h.b16 %v327
    %v1139 = vunpack.c.l.b16 %v328
    %v1140 = vunpack.c.h.b16 %v328
    %v1141 = vunpack.c.l.b16 %v329
    %v1142 = vunpack.c.h.b16 %v329
    %v1143 = vunpack.c.l.b16 %v330
    %v1144 = vunpack.c.h.b16 %v330
    %v1145 = vunpack.c.l.b16 %v331
    %v1146 = vunpack.c.h.b16 %v331
    %v1147 = vunpack.c.l.b16 %v332
    %v1148 = vunpack.c.h.b16 %v332
    %v1149 = vunpack.c.l.b16 %v333
    %v1150 = vunpack.c.h.b16 %v333
    %v1151 = vunpack.c.l.b16 %v334
    %v1152 = vunpack.c.h.b16 %v334
    %v1153 = vunpack.c.l.b16 %v335
    %v1154 = vunpack.c.h.b16 %v335
    %v1155 = vunpack.c.l.b16 %v336
    %v1156 = vunpack.c.h.b16 %v336
    %v1157 = vunpack.c.l.b16 %v337
    %v1158 = vunpack.c.h.b16 %v337
    %v1159 = vunpack.c.l.b16 %v338
    %v1160 = vunpack.c.h.b16 %v338
    %v1161 = vunpack.c.l.b16 %v339
    %v1162 = vunpack.c.h.b16 %v339
    %v1163 = vunpack.c.l.b16 %v340
    %v1164 = vunpack.c.h.b16 %v340
    %v1165 = vunpack.c.l.b16 %v341
    %v1166 = vunpack.c.h.b16 %v341
    %v1167 = vunpack.c.l.b16 %v342
    %v1168 = vunpack.c.h.b16 %v342
    %v1169 = vunpack.c.l.b16 %v343
    %v1170 = vunpack.c.h.b16 %v343
    %v1171 = vunpack.c.l.b16 %v344
    %v1172 = vunpack.c.h.b16 %v344
    %v1173 = vunpack.c.l.b16 %v345
    %v1174 = vunpack.c.h.b16 %v345
    %v1175 = vunpack.c.l.b16 %v346
    %v1176 = vunpack.c.h.b16 %v346
    %v1177 = vpack.c.b16 %v669, %v665
    %v1178 = vpack.c.b16 %v670, %v666
    %v1179 = vpack.c.b16 %v671, %v667
    %v1180 = vpack.c.b16 %v672, %v668
    %v1181 = vpack.c.b16 %v677, %v673
    %v1182 = vpack.c.b16 %v678, %v674
    %v1183 = vpack.c.b16 %v679, %v675
    %v1184 = vpack.c.b16 %v680, %v676
    %v1185 = vpack.c.b16 %v685, %v681
    %v1186 = vpack.c.b16 %v686, %v682
    %v1187 = vpack.c.b16 %v687, %v683
    %v1188 = vpack.c.b16 %v688, %v684
    %v1189 = vpack.c.b16 %v693, %v689
    %v1190 = vpack.c.b16 %v694, %v690
    %v1191 = vpack.c.b16 %v695, %v691
    %v1192 = vpack.c.b16 %v696, %v692
    %v1193 = vpack.c.b16 %v701, %v697
    %v1194 = vpack.c.b16 %v702, %v698
    %v1195 = vpack.c.b16 %v703, %v699
    %v1196 = vpack.c.b16 %v704, %v700
    %v1197 = vpack.c.b16 %v709, %v705
    %v1198 = vpack.c.b16 %v710, %v706
    %v1199 = vpack.c.b16 %v711, %v707
    %v1200 = vpack.c.b16 %v712, %v708
    %v1201 = vpack.c.b16 %v717, %v713
    %v1202 = vpack.c.b16 %v718, %v714
    %v1203 = vpack.c.b16 %v719, %v715
    %v1204 = vpack.c.b16 %v720, %v716
    %v1205 = vpack.c.b16 %v725, %v721
    %v1206 = vpack.c.b16 %v726, %v722
    %v1207 = vpack.c.b16 %v727, %v723
    %v1208 = vpack.c.b16 %v728, %v724
    %v1209 = vpack.c.b16 %v733, %v729
    %v1210 = vpack.c.b16 %v734, %v730
    %v1211 = vpack.c.b16 %v735, %v731
    %v1212 = vpack.c.b16 %v736, %v732
    %v1213 = vpack.c.b16 %v741, %v737
    %v1214 = vpack.c.b16 %v742, %v738
    %v1215 = vpack.c.b16 %v743, %v739
    %v1216 = vpack.c.b16 %v744, %v740
    %v1217 = vpack.c.b16 %v749, %v745
    %v1218 = vpack.c.b16 %v750, %v746
    %v1219 = vpack.c.b16 %v751, %v747
    %v1220 = vpack.c.b16 %v752, %v748
    %v1221 = vpack.c.b16 %v757, %v753
    %v1222 = vpack.c.b16 %v758, %v754
    %v1223 = vpack.c.b16 %v759, %v755
    %v1224 = vpack.c.b16 %v760, %v756
    %v1225 = vpack.c.b16 %v765, %v761
    %v1226 = vpack.c.b16 %v766, %v762
    %v1227 = vpack.c.b16 %v767, %v763
    %v1228 = vpack.c.b16 %v768, %v764
    %v1229 = vpack.c.b16 %v773, %v769
    %v1230 = vpack.c.b16 %v774, %v770
    %v1231 = vpack.c.b16 %v775, %v771
    %v1232 = vpack.c.b16 %v776, %v772
    %v1233 = vpack.c.b16 %v781, %v777
    %v1234 = vpack.c.b16 %v782, %v778
    %v1235 = vpack.c.b16 %v783, %v779
    %v1236 = vpack.c.b16 %v784, %v780
    %v1237 = vpack.c.b16 %v789, %v785
    %v1238 = vpack.c.b16 %v790, %v786
    %v1239 = vpack.c.b16 %v791, %v787
    %v1240 = vpack.c.b16 %v792, %v788
    %v1241 = vpack.c.b16 %v797, %v793
    %v1242 = vpack.c.b16 %v798, %v794
    %v1243 = vpack.c.b16 %v799, %v795
    %v1244 = vpack.c.b16 %v800, %v796
    %v1245 = vpack.c.b16 %v805, %v801
    %v1246 = vpack.c.b16 %v806, %v802
    %v1247 = vpack.c.b16 %v807, %v803
    %v1248 = vpack.c.b16 %v808, %v804
    %v1249 = vpack.c.b16 %v813, %v809
    %v1250 = vpack.c.b16 %v814, %v810
    %v1251 = vpack.c.b16 %v815, %v811
    %v1252 = vpack.c.b16 %v816, %v812
    %v1253 = vpack.c.b16 %v821, %v817
    %v1254 = vpack.c.b16 %v822, %v818
    %v1255 = vpack.c.b16 %v823, %v819
    %v1256 = vpack.c.b16 %v824, %v820
    %v1257 = vpack.c.b16 %v829, %v825
    %v1258 = vpack.c.b16 %v830, %v826
    %v1259 = vpack.c.b16 %v831, %v827
    %v1260 = vpack.c.b16 %v832, %v828
    %v1261 = vpack.c.b16 %v837, %v833
    %v1262 = vpack.c.b16 %v838, %v834
    %v1263 = vpack.c.b16 %v839, %v835
    %v1264 = vpack.c.b16 %v840, %v836
    %v1265 = vpack.c.b16 %v845, %v841
    %v1266 = vpack.c.b16 %v846, %v842
    %v1267 = vpack.c.b16 %v847, %v843
    %v1268 = vpack.c.b16 %v848, %v844
    %v1269 = vpack.c.b16 %v853, %v849
    %v1270 = vpack.c.b16 %v854, %v850
    %v1271 = vpack.c.b16 %v855, %v851
    %v1272 = vpack.c.b16 %v856, %v852
    %v1273 = vpack.c.b16 %v861, %v857
    %v1274 = vpack.c.b16 %v862, %v858
    %v1275 = vpack.c.b16 %v863, %v859
    %v1276 = vpack.c.b16 %v864, %v860
    %v1277 = vpack.c.b16 %v869, %v865
    %v1278 = vpack.c.b16 %v870, %v866
    %v1279 = vpack.c.b16 %v871, %v867
    %v1280 = vpack.c.b16 %v872, %v868
    %v1281 = vpack.c.b16 %v877, %v873
    %v1282 = vpack.c.b16 %v878, %v874
    %v1283 = vpack.c.b16 %v879, %v875
    %v1284 = vpack.c.b16 %v880, %v876
    %v1285 = vpack.c.b16 %v885, %v881
    %v1286 = vpack.c.b16 %v886, %v882
    %v1287 = vpack.c.b16 %v887, %v883
    %v1288 = vpack.c.b16 %v888, %v884
    %v1289 = vpack.c.b16 %v893, %v889
    %v1290 = vpack.c.b16 %v894, %v890
    %v1291 = vpack.c.b16 %v895, %v891
    %v1292 = vpack.c.b16 %v896, %v892
    %v1293 = vpack.c.b16 %v901, %v897
    %v1294 = vpack.c.b16 %v902, %v898
    %v1295 = vpack.c.b16 %v903, %v899
    %v1296 = vpack.c.b16 %v904, %v900
    %v1297 = vpack.c.b16 %v909, %v905
    %v1298 = vpack.c.b16 %v910, %v906
    %v1299 = vpack.c.b16 %v911, %v907
    %v1300 = vpack.c.b16 %v912, %v908
    %v1301 = vpack.c.b16 %v917, %v913
    %v1302 = vpack.c.b16 %v918, %v914
    %v1303 = vpack.c.b16 %v919, %v915
    %v1304 = vpack.c.b16 %v920, %v916
    %v1305 = vpack.c.b16 %v925, %v921
    %v1306 = vpack.c.b16 %v926, %v922
    %v1307 = vpack.c.b16 %v927, %v923
    %v1308 = vpack.c.b16 %v928, %v924
    %v1309 = vpack.c.b16 %v933, %v929
    %v1310 = vpack.c.b16 %v934, %v930
    %v1311 = vpack.c.b16 %v935, %v931
    %v1312 = vpack.c.b16 %v936, %v932
    %v1313 = vpack.c.b16 %v941, %v937
    %v1314 = vpack.c.b16 %v942, %v938
    %v1315 = vpack.c.b16 %v943, %v939
    %v1316 = vpack.c.b16 %v944, %v940
    %v1317 = vpack.c.b16 %v949, %v945
    %v1318 = vpack.c.b16 %v950, %v946
    %v1319 = vpack.c.b16 %v951, %v947
    %v1320 = vpack.c.b16 %v952, %v948
    %v1321 = vpack.c.b16 %v957, %v953
    %v1322 = vpack.c.b16 %v958, %v954
    %v1323 = vpack.c.b16 %v959, %v955
    %v1324 = vpack.c.b16 %v960, %v956
    %v1325 = vpack.c.b16 %v965, %v961
    %v1326 = vpack.c.b16 %v966, %v962
    %v1327 = vpack.c.b16 %v967, %v963
    %v1328 = vpack.c.b16 %v968, %v964
    %v1329 = vpack.c.b16 %v973, %v969
    %v1330 = vpack.c.b16 %v974, %v970
    %v1331 = vpack.c.b16 %v975, %v971
    %v1332 = vpack.c.b16 %v976, %v972
    %v1333 = vpack.c.b16 %v981, %v977
    %v1334 = vpack.c.b16 %v982, %v978
    %v1335 = vpack.c.b16 %v983, %v979
    %v1336 = vpack.c.b16 %v984, %v980
    %v1337 = vpack.c.b16 %v989, %v985
    %v1338 = vpack.c.b16 %v990, %v986
    %v1339 = vpack.c.b16 %v991, %v987
    %v1340 = vpack.c.b16 %v992, %v988
    %v1341 = vpack.c.b16 %v997, %v993
    %v1342 = vpack.c.b16 %v998, %v994
    %v1343 = vpack.c.b16 %v999, %v995
    %v1344 = vpack.c.b16 %v1000, %v996
    %v1345 = vpack.c.b16 %v1005, %v1001
    %v1346 = vpack.c.b16 %v1006, %v1002
    %v1347 = vpack.c.b16 %v1007, %v1003
    %v1348 = vpack.c.b16 %v1008, %v1004
    %v1349 = vpack.c.b16 %v1013, %v1009
    %v1350 = vpack.c.b16 %v1014, %v1010
    %v1351 = vpack.c.b16 %v1015, %v1011
    %v1352 = vpack.c.b16 %v1016, %v1012
    %v1353 = vpack.c.b16 %v1021, %v1017
    %v1354 = vpack.c.b16 %v1022, %v1018
    %v1355 = vpack.c.b16 %v1023, %v1019
    %v1356 = vpack.c.b16 %v1024, %v1020
    %v1357 = vpack.c.b16 %v1029, %v1025
    %v1358 = vpack.c.b16 %v1030, %v1026
    %v1359 = vpack.c.b16 %v1031, %v1027
    %v1360 = vpack.c.b16 %v1032, %v1028
    %v1361 = vpack.c.b16 %v1037, %v1033
    %v1362 = vpack.c.b16 %v1038, %v1034
    %v1363 = vpack.c.b16 %v1039, %v1035
    %v1364 = vpack.c.b16 %v1040, %v1036
    %v1365 = vpack.c.b16 %v1045, %v1041
    %v1366 = vpack.c.b16 %v1046, %v1042
    %v1367 = vpack.c.b16 %v1047, %v1043
    %v1368 = vpack.c.b16 %v1048, %v1044
    %v1369 = vpack.c.b16 %v1053, %v1049
    %v1370 = vpack.c.b16 %v1054, %v1050
    %v1371 = vpack.c.b16 %v1055, %v1051
    %v1372 = vpack.c.b16 %v1056, %v1052
    %v1373 = vpack.c.b16 %v1061, %v1057
    %v1374 = vpack.c.b16 %v1062, %v1058
    %v1375 = vpack.c.b16 %v1063, %v1059
    %v1376 = vpack.c.b16 %v1064, %v1060
    %v1377 = vpack.c.b16 %v1069, %v1065
    %v1378 = vpack.c.b16 %v1070, %v1066
    %v1379 = vpack.c.b16 %v1071, %v1067
    %v1380 = vpack.c.b16 %v1072, %v1068
    %v1381 = vpack.c.b16 %v1077, %v1073
    %v1382 = vpack.c.b16 %v1078, %v1074
    %v1383 = vpack.c.b16 %v1079, %v1075
    %v1384 = vpack.c.b16 %v1080, %v1076
    %v1385 = vpack.c.b16 %v1085, %v1081
    %v1386 = vpack.c.b16 %v1086, %v1082
    %v1387 = vpack.c.b16 %v1087, %v1083
    %v1388 = vpack.c.b16 %v1088, %v1084
    %v1389 = vpack.c.b16 %v1093, %v1089
    %v1390 = vpack.c.b16 %v1094, %v1090
    %v1391 = vpack.c.b16 %v1095, %v1091
    %v1392 = vpack.c.b16 %v1096, %v1092
    %v1393 = vpack.c.b16 %v1101, %v1097
    %v1394 = vpack.c.b16 %v1102, %v1098
    %v1395 = vpack.c.b16 %v1103, %v1099
    %v1396 = vpack.c.b16 %v1104, %v1100
    %v1397 = vpack.c.b16 %v1109, %v1105
    %v1398 = vpack.c.b16 %v1110, %v1106
    %v1399 = vpack.c.b16 %v1111, %v1107
    %v1400 = vpack.c.b16 %v1112, %v1108
    %v1401 = vpack.c.b16 %v1117, %v1113
    %v1402 = vpack.c.b16 %v1118, %v1114
    %v1403 = vpack.c.b16 %v1119, %v1115
    %v1404 = vpack.c.b16 %v1120, %v1116
    %v1405 = vpack.c.b16 %v1125, %v1121
    %v1406 = vpack.c.b16 %v1126, %v1122
    %v1407 = vpack.c.b16 %v1127, %v1123
    %v1408 = vpack.c.b16 %v1128, %v1124
    %v1409 = vpack.c.b16 %v1133, %v1129
    %v1410 = vpack.c.b16 %v1134, %v1130
    %v1411 = vpack.c.b16 %v1135, %v1131
    %v1412 = vpack.c.b16 %v1136, %v1132
    %v1413 = vpack.c.b16 %v1141, %v1137
    %v1414 = vpack.c.b16 %v1142, %v1138
    %v1415 = vpack.c.b16 %v1143, %v1139
    %v1416 = vpack.c.b16 %v1144, %v1140
    %v1417 = vpack.c.b16 %v1149, %v1145
    %v1418 = vpack.c.b16 %v1150, %v1146
    %v1419 = vpack.c.b16 %v1151, %v1147
    %v1420 = vpack.c.b16 %v1152, %v1148
    %v1421 = vpack.c.b16 %v1157, %v1153
    %v1422 = vpack.c.b16 %v1158, %v1154
    %v1423 = vpack.c.b16 %v1159, %v1155
    %v1424 = vpack.c.b16 %v1160, %v1156
    %v1425 = vpack.c.b16 %v1165, %v1161
    %v1426 = vpack.c.b16 %v1166, %v1162
    %v1427 = vpack.c.b16 %v1167, %v1163
    %v1428 = vpack.c.b16 %v1168, %v1164
    %v1429 = vpack.c.b16 %v1173, %v1169
    %v1430 = vpack.c.b16 %v1174, %v1170
    %v1431 = vpack.c.b16 %v1175, %v1171
    %v1432 = vpack.c.b16 %v1176, %v1172
    %1689 = vmatprep.subr.bf16.mxu0 %v1178
    %1690 = vmatpush1.bf16.msra.mxu0 %v1177
    %1691 = vmatprep.subr.bf16.mxu0 %v1182
    %1692 = vmatpush1.bf16.msra.mxu0 %v1181
    %1693 = vmatprep.subr.bf16.mxu0 %v1186
    %1694 = vmatpush1.bf16.msra.mxu0 %v1185
    %1695 = vmatprep.subr.bf16.mxu0 %v1190
    %1696 = vmatpush1.bf16.msra.mxu0 %v1189
    %1697 = vmatprep.subr.bf16.mxu0 %v1194
    %1698 = vmatpush1.bf16.msra.mxu0 %v1193
    %1699 = vmatprep.subr.bf16.mxu0 %v1198
    %1700 = vmatpush1.bf16.msra.mxu0 %v1197
    %1701 = vmatprep.subr.bf16.mxu0 %v1202
    %1702 = vmatpush1.bf16.msra.mxu0 %v1201
    %1703 = vmatprep.subr.bf16.mxu0 %v1206
    %1704 = vmatpush1.bf16.msra.mxu0 %v1205
    %1705 = vmatprep.subr.bf16.mxu0 %v1210
    %1706 = vmatpush1.bf16.msra.mxu0 %v1209
    %1707 = vmatprep.subr.bf16.mxu0 %v1214
    %1708 = vmatpush1.bf16.msra.mxu0 %v1213
    %1709 = vmatprep.subr.bf16.mxu0 %v1218
    %1710 = vmatpush1.bf16.msra.mxu0 %v1217
    %1711 = vmatprep.subr.bf16.mxu0 %v1222
    %1712 = vmatpush1.bf16.msra.mxu0 %v1221
    %1713 = vmatprep.subr.bf16.mxu0 %v1226
    %1714 = vmatpush1.bf16.msra.mxu0 %v1225
    %1715 = vmatprep.subr.bf16.mxu0 %v1230
    %1716 = vmatpush1.bf16.msra.mxu0 %v1229
    %1717 = vmatprep.subr.bf16.mxu0 %v1234
    %1718 = vmatpush1.bf16.msra.mxu0 %v1233
    %1719 = vmatprep.subr.bf16.mxu0 %v1238
    %1720 = vmatpush1.bf16.msra.mxu0 %v1237
    %1721 = vmatprep.mubr.bf16.mxu0 %v394
    %1722 = vmatmul.mubr.bf16.gmra.mrb[0].mxu0 %v393
    %v1723 = vpop.f32.mrb[0].mxu0
    %v1724 = vadd.f32 %v352, %v1723
    %v1725 = vpop.f32.mrb[0].mxu0
    %v1726 = vadd.f32 %v356, %v1725
    %v1727 = vpop.f32.mrb[0].mxu0
    %v1728 = vadd.f32 %v352, %v1727
    %v1729 = vpop.f32.mrb[0].mxu0
    %v1730 = vadd.f32 %v356, %v1729
    %1731 = vdwg.mxu0
    %1732 = vmatprep.subr.bf16.mxu0 %v1242
    %1733 = vmatpush1.bf16.msra.mxu0 %v1241
    %1734 = vmatprep.subr.bf16.mxu0 %v1246
    %1735 = vmatpush1.bf16.msra.mxu0 %v1245
    %1736 = vmatprep.subr.bf16.mxu0 %v1250
    %1737 = vmatpush1.bf16.msra.mxu0 %v1249
    %1738 = vmatprep.subr.bf16.mxu0 %v1254
    %1739 = vmatpush1.bf16.msra.mxu0 %v1253
    %1740 = vmatprep.subr.bf16.mxu0 %v1258
    %1741 = vmatpush1.bf16.msra.mxu0 %v1257
    %1742 = vmatprep.subr.bf16.mxu0 %v1262
    %1743 = vmatpush1.bf16.msra.mxu0 %v1261
    %1744 = vmatprep.subr.bf16.mxu0 %v1266
    %1745 = vmatpush1.bf16.msra.mxu0 %v1265
    %1746 = vmatprep.subr.bf16.mxu0 %v1270
    %1747 = vmatpush1.bf16.msra.mxu0 %v1269
    %1748 = vmatprep.subr.bf16.mxu0 %v1274
    %1749 = vmatpush1.bf16.msra.mxu0 %v1273
    %1750 = vmatprep.subr.bf16.mxu0 %v1278
    %1751 = vmatpush1.bf16.msra.mxu0 %v1277
    %1752 = vmatprep.subr.bf16.mxu0 %v1282
    %1753 = vmatpush1.bf16.msra.mxu0 %v1281
    %1754 = vmatprep.subr.bf16.mxu0 %v1286
    %1755 = vmatpush1.bf16.msra.mxu0 %v1285
    %1756 = vmatprep.subr.bf16.mxu0 %v1290
    %1757 = vmatpush1.bf16.msra.mxu0 %v1289
    %1758 = vmatprep.subr.bf16.mxu0 %v1294
    %1759 = vmatpush1.bf16.msra.mxu0 %v1293
    %1760 = vmatprep.subr.bf16.mxu0 %v1298
    %1761 = vmatpush1.bf16.msra.mxu0 %v1297
    %1762 = vmatprep.subr.bf16.mxu0 %v1302
    %1763 = vmatpush1.bf16.msra.mxu0 %v1301
    %1764 = vmatprep.mubr.bf16.mxu0 %v396
    %1765 = vmatmul.mubr.bf16.gmra.mrb[0].mxu0 %v395
    %v1766 = vpop.f32.mrb[0].mxu0
    %v1767 = vadd.f32 %v1724, %v1766
    %v1768 = vpop.f32.mrb[0].mxu0
    %v1769 = vadd.f32 %v1726, %v1768
    %v1770 = vpop.f32.mrb[0].mxu0
    %v1771 = vadd.f32 %v1728, %v1770
    %v1772 = vpop.f32.mrb[0].mxu0
    %v1773 = vadd.f32 %v1730, %v1772
    %1774 = vdwg.mxu0
    %1775 = vmatprep.subr.bf16.mxu0 %v1306
    %1776 = vmatpush1.bf16.msra.mxu0 %v1305
    %1777 = vmatprep.subr.bf16.mxu0 %v1310
    %1778 = vmatpush1.bf16.msra.mxu0 %v1309
    %1779 = vmatprep.subr.bf16.mxu0 %v1314
    %1780 = vmatpush1.bf16.msra.mxu0 %v1313
    %1781 = vmatprep.subr.bf16.mxu0 %v1318
    %1782 = vmatpush1.bf16.msra.mxu0 %v1317
    %1783 = vmatprep.subr.bf16.mxu0 %v1322
    %1784 = vmatpush1.bf16.msra.mxu0 %v1321
    %1785 = vmatprep.subr.bf16.mxu0 %v1326
    %1786 = vmatpush1.bf16.msra.mxu0 %v1325
    %1787 = vmatprep.subr.bf16.mxu0 %v1330
    %1788 = vmatpush1.bf16.msra.mxu0 %v1329
    %1789 = vmatprep.subr.bf16.mxu0 %v1334
    %1790 = vmatpush1.bf16.msra.mxu0 %v1333
    %1791 = vmatprep.subr.bf16.mxu0 %v1338
    %1792 = vmatpush1.bf16.msra.mxu0 %v1337
    %1793 = vmatprep.subr.bf16.mxu0 %v1342
    %1794 = vmatpush1.bf16.msra.mxu0 %v1341
    %1795 = vmatprep.subr.bf16.mxu0 %v1346
    %1796 = vmatpush1.bf16.msra.mxu0 %v1345
    %1797 = vmatprep.subr.bf16.mxu0 %v1350
    %1798 = vmatpush1.bf16.msra.mxu0 %v1349
    %1799 = vmatprep.subr.bf16.mxu0 %v1354
    %1800 = vmatpush1.bf16.msra.mxu0 %v1353
    %1801 = vmatprep.subr.bf16.mxu0 %v1358
    %1802 = vmatpush1.bf16.msra.mxu0 %v1357
    %1803 = vmatprep.subr.bf16.mxu0 %v1362
    %1804 = vmatpush1.bf16.msra.mxu0 %v1361
    %1805 = vmatprep.subr.bf16.mxu0 %v1366
    %1806 = vmatpush1.bf16.msra.mxu0 %v1365
    %1807 = vmatprep.mubr.bf16.mxu0 %v398
    %1808 = vmatmul.mubr.bf16.gmra.mrb[0].mxu0 %v397
    %v1809 = vpop.f32.mrb[0].mxu0
    %v1810 = vadd.f32 %v1767, %v1809
    %v1811 = vpop.f32.mrb[0].mxu0
    %v1812 = vadd.f32 %v1769, %v1811
    %v1813 = vpop.f32.mrb[0].mxu0
    %v1814 = vadd.f32 %v1771, %v1813
    %v1815 = vpop.f32.mrb[0].mxu0
    %v1816 = vadd.f32 %v1773, %v1815
    %1817 = vdwg.mxu0
    %1818 = vmatprep.subr.bf16.mxu0 %v1370
    %1819 = vmatpush1.bf16.msra.mxu0 %v1369
    %1820 = vmatprep.subr.bf16.mxu0 %v1374
    %1821 = vmatpush1.bf16.msra.mxu0 %v1373
    %1822 = vmatprep.subr.bf16.mxu0 %v1378
    %1823 = vmatpush1.bf16.msra.mxu0 %v1377
    %1824 = vmatprep.subr.bf16.mxu0 %v1382
    %1825 = vmatpush1.bf16.msra.mxu0 %v1381
    %1826 = vmatprep.subr.bf16.mxu0 %v1386
    %1827 = vmatpush1.bf16.msra.mxu0 %v1385
    %1828 = vmatprep.subr.bf16.mxu0 %v1390
    %1829 = vmatpush1.bf16.msra.mxu0 %v1389
    %1830 = vmatprep.subr.bf16.mxu0 %v1394
    %1831 = vmatpush1.bf16.msra.mxu0 %v1393
    %1832 = vmatprep.subr.bf16.mxu0 %v1398
    %1833 = vmatpush1.bf16.msra.mxu0 %v1397
    %1834 = vmatprep.subr.bf16.mxu0 %v1402
    %1835 = vmatpush1.bf16.msra.mxu0 %v1401
    %1836 = vmatprep.subr.bf16.mxu0 %v1406
    %1837 = vmatpush1.bf16.msra.mxu0 %v1405
    %1838 = vmatprep.subr.bf16.mxu0 %v1410
    %1839 = vmatpush1.bf16.msra.mxu0 %v1409
    %1840 = vmatprep.subr.bf16.mxu0 %v1414
    %1841 = vmatpush1.bf16.msra.mxu0 %v1413
    %1842 = vmatprep.subr.bf16.mxu0 %v1418
    %1843 = vmatpush1.bf16.msra.mxu0 %v1417
    %1844 = vmatprep.subr.bf16.mxu0 %v1422
    %1845 = vmatpush1.bf16.msra.mxu0 %v1421
    %1846 = vmatprep.subr.bf16.mxu0 %v1426
    %1847 = vmatpush1.bf16.msra.mxu0 %v1425
    %1848 = vmatprep.subr.bf16.mxu0 %v1430
    %1849 = vmatpush1.bf16.msra.mxu0 %v1429
    %1850 = vmatprep.mubr.bf16.mxu0 %v400
    %1851 = vmatmul.mubr.bf16.gmra.mrb[0].mxu0 %v399
    %v1852 = vpop.f32.mrb[0].mxu0
    %v1853 = vadd.f32 %v1810, %v1852
    %v1854 = vpop.f32.mrb[0].mxu0
    %v1855 = vadd.f32 %v1812, %v1854
    %v1856 = vpop.f32.mrb[0].mxu0
    %v1857 = vadd.f32 %v1814, %v1856
    %v1858 = vpop.f32.mrb[0].mxu0
    %v1859 = vadd.f32 %v1816, %v1858
    %1860 = vdwg.mxu0
    %1861 = vmatprep.subr.bf16.mxu0 %v1180
    %1862 = vmatpush1.bf16.msra.mxu0 %v1179
    %1863 = vmatprep.subr.bf16.mxu0 %v1184
    %1864 = vmatpush1.bf16.msra.mxu0 %v1183
    %1865 = vmatprep.subr.bf16.mxu0 %v1188
    %1866 = vmatpush1.bf16.msra.mxu0 %v1187
    %1867 = vmatprep.subr.bf16.mxu0 %v1192
    %1868 = vmatpush1.bf16.msra.mxu0 %v1191
    %1869 = vmatprep.subr.bf16.mxu0 %v1196
    %1870 = vmatpush1.bf16.msra.mxu0 %v1195
    %1871 = vmatprep.subr.bf16.mxu0 %v1200
    %1872 = vmatpush1.bf16.msra.mxu0 %v1199
    %1873 = vmatprep.subr.bf16.mxu0 %v1204
    %1874 = vmatpush1.bf16.msra.mxu0 %v1203
    %1875 = vmatprep.subr.bf16.mxu0 %v1208
    %1876 = vmatpush1.bf16.msra.mxu0 %v1207
    %1877 = vmatprep.subr.bf16.mxu0 %v1212
    %1878 = vmatpush1.bf16.msra.mxu0 %v1211
    %1879 = vmatprep.subr.bf16.mxu0 %v1216
    %1880 = vmatpush1.bf16.msra.mxu0 %v1215
    %1881 = vmatprep.subr.bf16.mxu0 %v1220
    %1882 = vmatpush1.bf16.msra.mxu0 %v1219
    %1883 = vmatprep.subr.bf16.mxu0 %v1224
    %1884 = vmatpush1.bf16.msra.mxu0 %v1223
    %1885 = vmatprep.subr.bf16.mxu0 %v1228
    %1886 = vmatpush1.bf16.msra.mxu0 %v1227
    %1887 = vmatprep.subr.bf16.mxu0 %v1232
    %1888 = vmatpush1.bf16.msra.mxu0 %v1231
    %1889 = vmatprep.subr.bf16.mxu0 %v1236
    %1890 = vmatpush1.bf16.msra.mxu0 %v1235
    %1891 = vmatprep.subr.bf16.mxu0 %v1240
    %1892 = vmatpush1.bf16.msra.mxu0 %v1239
    %1893 = vmatprep.mubr.bf16.mxu0 %v394
    %1894 = vmatmul.mubr.bf16.gmra.mrb[0].mxu0 %v393
    %v1895 = vpop.f32.mrb[0].mxu0
    %v1896 = vadd.f32 %v360, %v1895
    %v1897 = vpop.f32.mrb[0].mxu0
    %v1898 = vadd.f32 %v364, %v1897
    %v1899 = vpop.f32.mrb[0].mxu0
    %v1900 = vadd.f32 %v360, %v1899
    %v1901 = vpop.f32.mrb[0].mxu0
    %v1902 = vadd.f32 %v364, %v1901
    %1903 = vdwg.mxu0
    %1904 = vmatprep.subr.bf16.mxu0 %v1244
    %1905 = vmatpush1.bf16.msra.mxu0 %v1243
    %1906 = vmatprep.subr.bf16.mxu0 %v1248
    %1907 = vmatpush1.bf16.msra.mxu0 %v1247
    %1908 = vmatprep.subr.bf16.mxu0 %v1252
    %1909 = vmatpush1.bf16.msra.mxu0 %v1251
    %1910 = vmatprep.subr.bf16.mxu0 %v1256
    %1911 = vmatpush1.bf16.msra.mxu0 %v1255
    %1912 = vmatprep.subr.bf16.mxu0 %v1260
    %1913 = vmatpush1.bf16.msra.mxu0 %v1259
    %1914 = vmatprep.subr.bf16.mxu0 %v1264
    %1915 = vmatpush1.bf16.msra.mxu0 %v1263
    %1916 = vmatprep.subr.bf16.mxu0 %v1268
    %1917 = vmatpush1.bf16.msra.mxu0 %v1267
    %1918 = vmatprep.subr.bf16.mxu0 %v1272
    %1919 = vmatpush1.bf16.msra.mxu0 %v1271
    %1920 = vmatprep.subr.bf16.mxu0 %v1276
    %1921 = vmatpush1.bf16.msra.mxu0 %v1275
    %1922 = vmatprep.subr.bf16.mxu0 %v1280
    %1923 = vmatpush1.bf16.msra.mxu0 %v1279
    %1924 = vmatprep.subr.bf16.mxu0 %v1284
    %1925 = vmatpush1.bf16.msra.mxu0 %v1283
    %1926 = vmatprep.subr.bf16.mxu0 %v1288
    %1927 = vmatpush1.bf16.msra.mxu0 %v1287
    %1928 = vmatprep.subr.bf16.mxu0 %v1292
    %1929 = vmatpush1.bf16.msra.mxu0 %v1291
    %1930 = vmatprep.subr.bf16.mxu0 %v1296
    %1931 = vmatpush1.bf16.msra.mxu0 %v1295
    %1932 = vmatprep.subr.bf16.mxu0 %v1300
    %1933 = vmatpush1.bf16.msra.mxu0 %v1299
    %1934 = vmatprep.subr.bf16.mxu0 %v1304
    %1935 = vmatpush1.bf16.msra.mxu0 %v1303
    %1936 = vmatprep.mubr.bf16.mxu0 %v396
    %1937 = vmatmul.mubr.bf16.gmra.mrb[0].mxu0 %v395
    %v1938 = vpop.f32.mrb[0].mxu0
    %v1939 = vadd.f32 %v1896, %v1938
    %v1940 = vpop.f32.mrb[0].mxu0
    %v1941 = vadd.f32 %v1898, %v1940
    %v1942 = vpop.f32.mrb[0].mxu0
    %v1943 = vadd.f32 %v1900, %v1942
    %v1944 = vpop.f32.mrb[0].mxu0
    %v1945 = vadd.f32 %v1902, %v1944
    %1946 = vdwg.mxu0
    %1947 = vmatprep.subr.bf16.mxu0 %v1308
    %1948 = vmatpush1.bf16.msra.mxu0 %v1307
    %1949 = vmatprep.subr.bf16.mxu0 %v1312
    %1950 = vmatpush1.bf16.msra.mxu0 %v1311
    %1951 = vmatprep.subr.bf16.mxu0 %v1316
    %1952 = vmatpush1.bf16.msra.mxu0 %v1315
    %1953 = vmatprep.subr.bf16.mxu0 %v1320
    %1954 = vmatpush1.bf16.msra.mxu0 %v1319
    %1955 = vmatprep.subr.bf16.mxu0 %v1324
    %1956 = vmatpush1.bf16.msra.mxu0 %v1323
    %1957 = vmatprep.subr.bf16.mxu0 %v1328
    %1958 = vmatpush1.bf16.msra.mxu0 %v1327
    %1959 = vmatprep.subr.bf16.mxu0 %v1332
    %1960 = vmatpush1.bf16.msra.mxu0 %v1331
    %1961 = vmatprep.subr.bf16.mxu0 %v1336
    %1962 = vmatpush1.bf16.msra.mxu0 %v1335
    %1963 = vmatprep.subr.bf16.mxu0 %v1340
    %1964 = vmatpush1.bf16.msra.mxu0 %v1339
    %1965 = vmatprep.subr.bf16.mxu0 %v1344
    %1966 = vmatpush1.bf16.msra.mxu0 %v1343
    %1967 = vmatprep.subr.bf16.mxu0 %v1348
    %1968 = vmatpush1.bf16.msra.mxu0 %v1347
    %1969 = vmatprep.subr.bf16.mxu0 %v1352
    %1970 = vmatpush1.bf16.msra.mxu0 %v1351
    %1971 = vmatprep.subr.bf16.mxu0 %v1356
    %1972 = vmatpush1.bf16.msra.mxu0 %v1355
    %1973 = vmatprep.subr.bf16.mxu0 %v1360
    %1974 = vmatpush1.bf16.msra.mxu0 %v1359
    %1975 = vmatprep.subr.bf16.mxu0 %v1364
    %1976 = vmatpush1.bf16.msra.mxu0 %v1363
    %1977 = vmatprep.subr.bf16.mxu0 %v1368
    %1978 = vmatpush1.bf16.msra.mxu0 %v1367
    %1979 = vmatprep.mubr.bf16.mxu0 %v398
    %1980 = vmatmul.mubr.bf16.gmra.mrb[0].mxu0 %v397
    %v1981 = vpop.f32.mrb[0].mxu0
    %v1982 = vadd.f32 %v1939, %v1981
    %v1983 = vpop.f32.mrb[0].mxu0
    %v1984 = vadd.f32 %v1941, %v1983
    %v1985 = vpop.f32.mrb[0].mxu0
    %v1986 = vadd.f32 %v1943, %v1985
    %v1987 = vpop.f32.mrb[0].mxu0
    %v1988 = vadd.f32 %v1945, %v1987
    %1989 = vdwg.mxu0
    %1990 = vmatprep.subr.bf16.mxu0 %v1372
    %1991 = vmatpush1.bf16.msra.mxu0 %v1371
    %1992 = vmatprep.subr.bf16.mxu0 %v1376
    %1993 = vmatpush1.bf16.msra.mxu0 %v1375
    %1994 = vmatprep.subr.bf16.mxu0 %v1380
    %1995 = vmatpush1.bf16.msra.mxu0 %v1379
    %1996 = vmatprep.subr.bf16.mxu0 %v1384
    %1997 = vmatpush1.bf16.msra.mxu0 %v1383
    %1998 = vmatprep.subr.bf16.mxu0 %v1388
    %1999 = vmatpush1.bf16.msra.mxu0 %v1387
    %2000 = vmatprep.subr.bf16.mxu0 %v1392
    %2001 = vmatpush1.bf16.msra.mxu0 %v1391
    %2002 = vmatprep.subr.bf16.mxu0 %v1396
    %2003 = vmatpush1.bf16.msra.mxu0 %v1395
    %2004 = vmatprep.subr.bf16.mxu0 %v1400
    %2005 = vmatpush1.bf16.msra.mxu0 %v1399
    %2006 = vmatprep.subr.bf16.mxu0 %v1404
    %2007 = vmatpush1.bf16.msra.mxu0 %v1403
    %2008 = vmatprep.subr.bf16.mxu0 %v1408
    %2009 = vmatpush1.bf16.msra.mxu0 %v1407
    %2010 = vmatprep.subr.bf16.mxu0 %v1412
    %2011 = vmatpush1.bf16.msra.mxu0 %v1411
    %2012 = vmatprep.subr.bf16.mxu0 %v1416
    %2013 = vmatpush1.bf16.msra.mxu0 %v1415
    %2014 = vmatprep.subr.bf16.mxu0 %v1420
    %2015 = vmatpush1.bf16.msra.mxu0 %v1419
    %2016 = vmatprep.subr.bf16.mxu0 %v1424
    %2017 = vmatpush1.bf16.msra.mxu0 %v1423
    %2018 = vmatprep.subr.bf16.mxu0 %v1428
    %2019 = vmatpush1.bf16.msra.mxu0 %v1427
    %2020 = vmatprep.subr.bf16.mxu0 %v1432
    %2021 = vmatpush1.bf16.msra.mxu0 %v1431
    %2022 = vmatprep.mubr.bf16.mxu0 %v400
    %2023 = vmatmul.mubr.bf16.gmra.mrb[0].mxu0 %v399
    %v2024 = vpop.f32.mrb[0].mxu0
    %v2025 = vadd.f32 %v1982, %v2024
    %v2026 = vpop.f32.mrb[0].mxu0
    %v2027 = vadd.f32 %v1984, %v2026
    %v2028 = vpop.f32.mrb[0].mxu0
    %v2029 = vadd.f32 %v1986, %v2028
    %v2030 = vpop.f32.mrb[0].mxu0
    %v2031 = vadd.f32 %v1988, %v2030
    %2032 = vdwg.mxu0
    %v2033 = vmax.f32 %v1853, 0.0
    %v2034 = vmax.f32 %v1855, 0.0
    %v2035 = vmax.f32 %v2025, 0.0
    %v2036 = vmax.f32 %v2027, 0.0
    %v2037 = vmax.f32 %v1857, 0.0
    %v2038 = vmax.f32 %v1859, 0.0
    %v2039 = vmax.f32 %v2029, 0.0
    %v2040 = vmax.f32 %v2031, 0.0
    %v2041 = vpack.c.bf16 %v2037, %v2033
    %v2042 = vpack.c.bf16 %v2038, %v2034
    %v2043 = vpack.c.bf16 %v2039, %v2035
    %v2044 = vpack.c.bf16 %v2040, %v2036
    %v2045 = vld [vmem:[#allocation7] sm:$0xff]
    %v2046 = vld [vmem:[#allocation7 + $0x8] sm:$0xff]
    %v2047 = vld [vmem:[#allocation7 + $0x10] sm:$0xff]
    %v2048 = vld [vmem:[#allocation7 + $0x18] sm:$0xff]
    %v2049 = vld [vmem:[#allocation7 + $0x20] sm:$0xff]
    %v2050 = vld [vmem:[#allocation7 + $0x28] sm:$0xff]
    %v2051 = vld [vmem:[#allocation7 + $0x30] sm:$0xff]
    %v2052 = vld [vmem:[#allocation7 + $0x38] sm:$0xff]
    %v2053 = vld [vmem:[#allocation7 + $0x40] sm:$0xff]
    %v2054 = vld [vmem:[#allocation7 + $0x48] sm:$0xff]
    %v2055 = vld [vmem:[#allocation7 + $0x50] sm:$0xff]
    %v2056 = vld [vmem:[#allocation7 + $0x58] sm:$0xff]
    %v2057 = vld [vmem:[#allocation7 + $0x60] sm:$0xff]
    %v2058 = vld [vmem:[#allocation7 + $0x68] sm:$0xff]
    %v2059 = vld [vmem:[#allocation7 + $0x70] sm:$0xff]
    %v2060 = vld [vmem:[#allocation7 + $0x78] sm:$0xff]
    %v2061 = vld [vmem:[#allocation7 + $0x80] sm:$0xff]
    %v2062 = vld [vmem:[#allocation7 + $0x88] sm:$0xff]
    %v2063 = vld [vmem:[#allocation7 + $0x90] sm:$0xff]
    %v2064 = vld [vmem:[#allocation7 + $0x98] sm:$0xff]
    %v2065 = vld [vmem:[#allocation7 + $0xa0] sm:$0xff]
    %v2066 = vld [vmem:[#allocation7 + $0xa8] sm:$0xff]
    %v2067 = vld [vmem:[#allocation7 + $0xb0] sm:$0xff]
    %v2068 = vld [vmem:[#allocation7 + $0xb8] sm:$0xff]
    %v2069 = vld [vmem:[#allocation7 + $0xc0] sm:$0xff]
    %v2070 = vld [vmem:[#allocation7 + $0xc8] sm:$0xff]
    %v2071 = vld [vmem:[#allocation7 + $0xd0] sm:$0xff]
    %v2072 = vld [vmem:[#allocation7 + $0xd8] sm:$0xff]
    %v2073 = vld [vmem:[#allocation7 + $0xe0] sm:$0xff]
    %v2074 = vld [vmem:[#allocation7 + $0xe8] sm:$0xff]
    %v2075 = vld [vmem:[#allocation7 + $0xf0] sm:$0xff]
    %v2076 = vld [vmem:[#allocation7 + $0xf8] sm:$0xff]
    %v2077 = vld [vmem:[#allocation7 + $0x100] sm:$0xff]
    %v2078 = vld [vmem:[#allocation7 + $0x108] sm:$0xff]
    %v2079 = vld [vmem:[#allocation7 + $0x110] sm:$0xff]
    %v2080 = vld [vmem:[#allocation7 + $0x118] sm:$0xff]
    %v2081 = vld [vmem:[#allocation7 + $0x120] sm:$0xff]
    %v2082 = vld [vmem:[#allocation7 + $0x128] sm:$0xff]
    %v2083 = vld [vmem:[#allocation7 + $0x130] sm:$0xff]
    %v2084 = vld [vmem:[#allocation7 + $0x138] sm:$0xff]
    %v2085 = vld [vmem:[#allocation7 + $0x140] sm:$0xff]
    %v2086 = vld [vmem:[#allocation7 + $0x148] sm:$0xff]
    %v2087 = vld [vmem:[#allocation7 + $0x150] sm:$0xff]
    %v2088 = vld [vmem:[#allocation7 + $0x158] sm:$0xff]
    %v2089 = vld [vmem:[#allocation7 + $0x160] sm:$0xff]
    %v2090 = vld [vmem:[#allocation7 + $0x168] sm:$0xff]
    %v2091 = vld [vmem:[#allocation7 + $0x170] sm:$0xff]
    %v2092 = vld [vmem:[#allocation7 + $0x178] sm:$0xff]
    %v2093 = vld [vmem:[#allocation7 + $0x180] sm:$0xff]
    %v2094 = vld [vmem:[#allocation7 + $0x188] sm:$0xff]
    %v2095 = vld [vmem:[#allocation7 + $0x190] sm:$0xff]
    %v2096 = vld [vmem:[#allocation7 + $0x198] sm:$0xff]
    %v2097 = vld [vmem:[#allocation7 + $0x1a0] sm:$0xff]
    %v2098 = vld [vmem:[#allocation7 + $0x1a8] sm:$0xff]
    %v2099 = vld [vmem:[#allocation7 + $0x1b0] sm:$0xff]
    %v2100 = vld [vmem:[#allocation7 + $0x1b8] sm:$0xff]
    %v2101 = vld [vmem:[#allocation7 + $0x1c0] sm:$0xff]
    %v2102 = vld [vmem:[#allocation7 + $0x1c8] sm:$0xff]
    %v2103 = vld [vmem:[#allocation7 + $0x1d0] sm:$0xff]
    %v2104 = vld [vmem:[#allocation7 + $0x1d8] sm:$0xff]
    %v2105 = vld [vmem:[#allocation7 + $0x1e0] sm:$0xff]
    %v2106 = vld [vmem:[#allocation7 + $0x1e8] sm:$0xff]
    %v2107 = vld [vmem:[#allocation7 + $0x1f0] sm:$0xff]
    %v2108 = vld [vmem:[#allocation7 + $0x1f8] sm:$0xff]
    %v2109 = vld [vmem:[%s4] sm:$0x3]
    %v2111 = vlaneseq
    %v2112 = vshrl.u32 %v2111, 7
    %v2113 = vsub.s32 0, %v2112
    %v2114 = vrot.slane %v2109, %v2113
    %v2115 = vlaneseq
    %v2116 = vshrl.u32 %v2115, 7
    %v2117 = vsub.s32 1, %v2116
    %v2118 = vrot.slane %v2109, %v2117
    %v2185 = vunpack.c.l.b16 %v2045
    %v2186 = vunpack.c.h.b16 %v2045
    %v2187 = vunpack.c.l.b16 %v2046
    %v2188 = vunpack.c.h.b16 %v2046
    %v2189 = vunpack.c.l.b16 %v2047
    %v2190 = vunpack.c.h.b16 %v2047
    %v2191 = vunpack.c.l.b16 %v2048
    %v2192 = vunpack.c.h.b16 %v2048
    %v2193 = vunpack.c.l.b16 %v2049
    %v2194 = vunpack.c.h.b16 %v2049
    %v2195 = vunpack.c.l.b16 %v2050
    %v2196 = vunpack.c.h.b16 %v2050
    %v2197 = vunpack.c.l.b16 %v2051
    %v2198 = vunpack.c.h.b16 %v2051
    %v2199 = vunpack.c.l.b16 %v2052
    %v2200 = vunpack.c.h.b16 %v2052
    %v2201 = vunpack.c.l.b16 %v2053
    %v2202 = vunpack.c.h.b16 %v2053
    %v2203 = vunpack.c.l.b16 %v2054
    %v2204 = vunpack.c.h.b16 %v2054
    %v2205 = vunpack.c.l.b16 %v2055
    %v2206 = vunpack.c.h.b16 %v2055
    %v2207 = vunpack.c.l.b16 %v2056
    %v2208 = vunpack.c.h.b16 %v2056
    %v2209 = vunpack.c.l.b16 %v2057
    %v2210 = vunpack.c.h.b16 %v2057
    %v2211 = vunpack.c.l.b16 %v2058
    %v2212 = vunpack.c.h.b16 %v2058
    %v2213 = vunpack.c.l.b16 %v2059
    %v2214 = vunpack.c.h.b16 %v2059
    %v2215 = vunpack.c.l.b16 %v2060
    %v2216 = vunpack.c.h.b16 %v2060
    %v2217 = vunpack.c.l.b16 %v2061
    %v2218 = vunpack.c.h.b16 %v2061
    %v2219 = vunpack.c.l.b16 %v2062
    %v2220 = vunpack.c.h.b16 %v2062
    %v2221 = vunpack.c.l.b16 %v2063
    %v2222 = vunpack.c.h.b16 %v2063
    %v2223 = vunpack.c.l.b16 %v2064
    %v2224 = vunpack.c.h.b16 %v2064
    %v2225 = vunpack.c.l.b16 %v2065
    %v2226 = vunpack.c.h.b16 %v2065
    %v2227 = vunpack.c.l.b16 %v2066
    %v2228 = vunpack.c.h.b16 %v2066
    %v2229 = vunpack.c.l.b16 %v2067
    %v2230 = vunpack.c.h.b16 %v2067
    %v2231 = vunpack.c.l.b16 %v2068
    %v2232 = vunpack.c.h.b16 %v2068
    %v2233 = vunpack.c.l.b16 %v2069
    %v2234 = vunpack.c.h.b16 %v2069
    %v2235 = vunpack.c.l.b16 %v2070
    %v2236 = vunpack.c.h.b16 %v2070
    %v2237 = vunpack.c.l.b16 %v2071
    %v2238 = vunpack.c.h.b16 %v2071
    %v2239 = vunpack.c.l.b16 %v2072
    %v2240 = vunpack.c.h.b16 %v2072
    %v2241 = vunpack.c.l.b16 %v2073
    %v2242 = vunpack.c.h.b16 %v2073
    %v2243 = vunpack.c.l.b16 %v2074
    %v2244 = vunpack.c.h.b16 %v2074
    %v2245 = vunpack.c.l.b16 %v2075
    %v2246 = vunpack.c.h.b16 %v2075
    %v2247 = vunpack.c.l.b16 %v2076
    %v2248 = vunpack.c.h.b16 %v2076
    %v2249 = vunpack.c.l.b16 %v2077
    %v2250 = vunpack.c.h.b16 %v2077
    %v2251 = vunpack.c.l.b16 %v2078
    %v2252 = vunpack.c.h.b16 %v2078
    %v2253 = vunpack.c.l.b16 %v2079
    %v2254 = vunpack.c.h.b16 %v2079
    %v2255 = vunpack.c.l.b16 %v2080
    %v2256 = vunpack.c.h.b16 %v2080
    %v2257 = vunpack.c.l.b16 %v2081
    %v2258 = vunpack.c.h.b16 %v2081
    %v2259 = vunpack.c.l.b16 %v2082
    %v2260 = vunpack.c.h.b16 %v2082
    %v2261 = vunpack.c.l.b16 %v2083
    %v2262 = vunpack.c.h.b16 %v2083
    %v2263 = vunpack.c.l.b16 %v2084
    %v2264 = vunpack.c.h.b16 %v2084
    %v2265 = vunpack.c.l.b16 %v2085
    %v2266 = vunpack.c.h.b16 %v2085
    %v2267 = vunpack.c.l.b16 %v2086
    %v2268 = vunpack.c.h.b16 %v2086
    %v2269 = vunpack.c.l.b16 %v2087
    %v2270 = vunpack.c.h.b16 %v2087
    %v2271 = vunpack.c.l.b16 %v2088
    %v2272 = vunpack.c.h.b16 %v2088
    %v2273 = vunpack.c.l.b16 %v2089
    %v2274 = vunpack.c.h.b16 %v2089
    %v2275 = vunpack.c.l.b16 %v2090
    %v2276 = vunpack.c.h.b16 %v2090
    %v2277 = vunpack.c.l.b16 %v2091
    %v2278 = vunpack.c.h.b16 %v2091
    %v2279 = vunpack.c.l.b16 %v2092
    %v2280 = vunpack.c.h.b16 %v2092
    %v2281 = vunpack.c.l.b16 %v2093
    %v2282 = vunpack.c.h.b16 %v2093
    %v2283 = vunpack.c.l.b16 %v2094
    %v2284 = vunpack.c.h.b16 %v2094
    %v2285 = vunpack.c.l.b16 %v2095
    %v2286 = vunpack.c.h.b16 %v2095
    %v2287 = vunpack.c.l.b16 %v2096
    %v2288 = vunpack.c.h.b16 %v2096
    %v2289 = vunpack.c.l.b16 %v2097
    %v2290 = vunpack.c.h.b16 %v2097
    %v2291 = vunpack.c.l.b16 %v2098
    %v2292 = vunpack.c.h.b16 %v2098
    %v2293 = vunpack.c.l.b16 %v2099
    %v2294 = vunpack.c.h.b16 %v2099
    %v2295 = vunpack.c.l.b16 %v2100
    %v2296 = vunpack.c.h.b16 %v2100
    %v2297 = vunpack.c.l.b16 %v2101
    %v2298 = vunpack.c.h.b16 %v2101
    %v2299 = vunpack.c.l.b16 %v2102
    %v2300 = vunpack.c.h.b16 %v2102
    %v2301 = vunpack.c.l.b16 %v2103
    %v2302 = vunpack.c.h.b16 %v2103
    %v2303 = vunpack.c.l.b16 %v2104
    %v2304 = vunpack.c.h.b16 %v2104
    %v2305 = vunpack.c.l.b16 %v2105
    %v2306 = vunpack.c.h.b16 %v2105
    %v2307 = vunpack.c.l.b16 %v2106
    %v2308 = vunpack.c.h.b16 %v2106
    %v2309 = vunpack.c.l.b16 %v2107
    %v2310 = vunpack.c.h.b16 %v2107
    %v2311 = vunpack.c.l.b16 %v2108
    %v2312 = vunpack.c.h.b16 %v2108
    %v2313 = vpack.c.b16 %v2187, %v2185
    %v2314 = vpack.c.b16 %v2188, %v2186
    %v2315 = vpack.c.b16 %v2191, %v2189
    %v2316 = vpack.c.b16 %v2192, %v2190
    %v2317 = vpack.c.b16 %v2195, %v2193
    %v2318 = vpack.c.b16 %v2196, %v2194
    %v2319 = vpack.c.b16 %v2199, %v2197
    %v2320 = vpack.c.b16 %v2200, %v2198
    %v2321 = vpack.c.b16 %v2203, %v2201
    %v2322 = vpack.c.b16 %v2204, %v2202
    %v2323 = vpack.c.b16 %v2207, %v2205
    %v2324 = vpack.c.b16 %v2208, %v2206
    %v2325 = vpack.c.b16 %v2211, %v2209
    %v2326 = vpack.c.b16 %v2212, %v2210
    %v2327 = vpack.c.b16 %v2215, %v2213
    %v2328 = vpack.c.b16 %v2216, %v2214
    %v2329 = vpack.c.b16 %v2219, %v2217
    %v2330 = vpack.c.b16 %v2220, %v2218
    %v2331 = vpack.c.b16 %v2223, %v2221
    %v2332 = vpack.c.b16 %v2224, %v2222
    %v2333 = vpack.c.b16 %v2227, %v2225
    %v2334 = vpack.c.b16 %v2228, %v2226
    %v2335 = vpack.c.b16 %v2231, %v2229
    %v2336 = vpack.c.b16 %v2232, %v2230
    %v2337 = vpack.c.b16 %v2235, %v2233
    %v2338 = vpack.c.b16 %v2236, %v2234
    %v2339 = vpack.c.b16 %v2239, %v2237
    %v2340 = vpack.c.b16 %v2240, %v2238
    %v2341 = vpack.c.b16 %v2243, %v2241
    %v2342 = vpack.c.b16 %v2244, %v2242
    %v2343 = vpack.c.b16 %v2247, %v2245
    %v2344 = vpack.c.b16 %v2248, %v2246
    %v2345 = vpack.c.b16 %v2251, %v2249
    %v2346 = vpack.c.b16 %v2252, %v2250
    %v2347 = vpack.c.b16 %v2255, %v2253
    %v2348 = vpack.c.b16 %v2256, %v2254
    %v2349 = vpack.c.b16 %v2259, %v2257
    %v2350 = vpack.c.b16 %v2260, %v2258
    %v2351 = vpack.c.b16 %v2263, %v2261
    %v2352 = vpack.c.b16 %v2264, %v2262
    %v2353 = vpack.c.b16 %v2267, %v2265
    %v2354 = vpack.c.b16 %v2268, %v2266
    %v2355 = vpack.c.b16 %v2271, %v2269
    %v2356 = vpack.c.b16 %v2272, %v2270
    %v2357 = vpack.c.b16 %v2275, %v2273
    %v2358 = vpack.c.b16 %v2276, %v2274
    %v2359 = vpack.c.b16 %v2279, %v2277
    %v2360 = vpack.c.b16 %v2280, %v2278
    %v2361 = vpack.c.b16 %v2283, %v2281
    %v2362 = vpack.c.b16 %v2284, %v2282
    %v2363 = vpack.c.b16 %v2287, %v2285
    %v2364 = vpack.c.b16 %v2288, %v2286
    %v2365 = vpack.c.b16 %v2291, %v2289
    %v2366 = vpack.c.b16 %v2292, %v2290
    %v2367 = vpack.c.b16 %v2295, %v2293
    %v2368 = vpack.c.b16 %v2296, %v2294
    %v2369 = vpack.c.b16 %v2299, %v2297
    %v2370 = vpack.c.b16 %v2300, %v2298
    %v2371 = vpack.c.b16 %v2303, %v2301
    %v2372 = vpack.c.b16 %v2304, %v2302
    %v2373 = vpack.c.b16 %v2307, %v2305
    %v2374 = vpack.c.b16 %v2308, %v2306
    %v2375 = vpack.c.b16 %v2311, %v2309
    %v2376 = vpack.c.b16 %v2312, %v2310
    %2441 = vmatprep.subr.bf16.mxu0 %v2314
    %2442 = vmatpush1.bf16.msra.mxu0 %v2313
    %2443 = vmatprep.subr.bf16.mxu0 %v2316
    %2444 = vmatpush1.bf16.msra.mxu0 %v2315
    %2445 = vmatprep.subr.bf16.mxu0 %v2318
    %2446 = vmatpush1.bf16.msra.mxu0 %v2317
    %2447 = vmatprep.subr.bf16.mxu0 %v2320
    %2448 = vmatpush1.bf16.msra.mxu0 %v2319
    %2449 = vmatprep.subr.bf16.mxu0 %v2322
    %2450 = vmatpush1.bf16.msra.mxu0 %v2321
    %2451 = vmatprep.subr.bf16.mxu0 %v2324
    %2452 = vmatpush1.bf16.msra.mxu0 %v2323
    %2453 = vmatprep.subr.bf16.mxu0 %v2326
    %2454 = vmatpush1.bf16.msra.mxu0 %v2325
    %2455 = vmatprep.subr.bf16.mxu0 %v2328
    %2456 = vmatpush1.bf16.msra.mxu0 %v2327
    %2457 = vmatprep.subr.bf16.mxu0 %v2330
    %2458 = vmatpush1.bf16.msra.mxu0 %v2329
    %2459 = vmatprep.subr.bf16.mxu0 %v2332
    %2460 = vmatpush1.bf16.msra.mxu0 %v2331
    %2461 = vmatprep.subr.bf16.mxu0 %v2334
    %2462 = vmatpush1.bf16.msra.mxu0 %v2333
    %2463 = vmatprep.subr.bf16.mxu0 %v2336
    %2464 = vmatpush1.bf16.msra.mxu0 %v2335
    %2465 = vmatprep.subr.bf16.mxu0 %v2338
    %2466 = vmatpush1.bf16.msra.mxu0 %v2337
    %2467 = vmatprep.subr.bf16.mxu0 %v2340
    %2468 = vmatpush1.bf16.msra.mxu0 %v2339
    %2469 = vmatprep.subr.bf16.mxu0 %v2342
    %2470 = vmatpush1.bf16.msra.mxu0 %v2341
    %2471 = vmatprep.subr.bf16.mxu0 %v2344
    %2472 = vmatpush1.bf16.msra.mxu0 %v2343
    %2473 = vmatprep.mubr.bf16.mxu0 %v2042
    %2474 = vmatmul.mubr.bf16.gmra.mrb[0].mxu0 %v2041
    %v2475 = vpop.f32.mrb[0].mxu0
    %v2476 = vadd.f32 %v2114, %v2475
    %v2477 = vpop.f32.mrb[0].mxu0
    %v2478 = vadd.f32 %v2118, %v2477
    %v2479 = vpop.f32.mrb[0].mxu0
    %v2480 = vadd.f32 %v2114, %v2479
    %v2481 = vpop.f32.mrb[0].mxu0
    %v2482 = vadd.f32 %v2118, %v2481
    %2483 = vdwg.mxu0
    %2484 = vmatprep.subr.bf16.mxu0 %v2346
    %2485 = vmatpush1.bf16.msra.mxu0 %v2345
    %2486 = vmatprep.subr.bf16.mxu0 %v2348
    %2487 = vmatpush1.bf16.msra.mxu0 %v2347
    %2488 = vmatprep.subr.bf16.mxu0 %v2350
    %2489 = vmatpush1.bf16.msra.mxu0 %v2349
    %2490 = vmatprep.subr.bf16.mxu0 %v2352
    %2491 = vmatpush1.bf16.msra.mxu0 %v2351
    %2492 = vmatprep.subr.bf16.mxu0 %v2354
    %2493 = vmatpush1.bf16.msra.mxu0 %v2353
    %2494 = vmatprep.subr.bf16.mxu0 %v2356
    %2495 = vmatpush1.bf16.msra.mxu0 %v2355
    %2496 = vmatprep.subr.bf16.mxu0 %v2358
    %2497 = vmatpush1.bf16.msra.mxu0 %v2357
    %2498 = vmatprep.subr.bf16.mxu0 %v2360
    %2499 = vmatpush1.bf16.msra.mxu0 %v2359
    %2500 = vmatprep.subr.bf16.mxu0 %v2362
    %2501 = vmatpush1.bf16.msra.mxu0 %v2361
    %2502 = vmatprep.subr.bf16.mxu0 %v2364
    %2503 = vmatpush1.bf16.msra.mxu0 %v2363
    %2504 = vmatprep.subr.bf16.mxu0 %v2366
    %2505 = vmatpush1.bf16.msra.mxu0 %v2365
    %2506 = vmatprep.subr.bf16.mxu0 %v2368
    %2507 = vmatpush1.bf16.msra.mxu0 %v2367
    %2508 = vmatprep.subr.bf16.mxu0 %v2370
    %2509 = vmatpush1.bf16.msra.mxu0 %v2369
    %2510 = vmatprep.subr.bf16.mxu0 %v2372
    %2511 = vmatpush1.bf16.msra.mxu0 %v2371
    %2512 = vmatprep.subr.bf16.mxu0 %v2374
    %2513 = vmatpush1.bf16.msra.mxu0 %v2373
    %2514 = vmatprep.subr.bf16.mxu0 %v2376
    %2515 = vmatpush1.bf16.msra.mxu0 %v2375
    %2516 = vmatprep.mubr.bf16.mxu0 %v2044
    %2517 = vmatmul.mubr.bf16.gmra.mrb[0].mxu0 %v2043
    %v2518 = vpop.f32.mrb[0].mxu0
    %v2519 = vadd.f32 %v2476, %v2518
    %v2520 = vpop.f32.mrb[0].mxu0
    %v2521 = vadd.f32 %v2478, %v2520
    %v2522 = vpop.f32.mrb[0].mxu0
    %v2523 = vadd.f32 %v2480, %v2522
    %v2524 = vpop.f32.mrb[0].mxu0
    %v2525 = vadd.f32 %v2482, %v2524
    %2526 = vdwg.mxu0
    %v2527 = vmax.f32 %v2519, 0.0
    %v2528 = vmax.f32 %v2521, 0.0
    %v2529 = vmax.f32 %v2523, 0.0
    %v2530 = vmax.f32 %v2525, 0.0
    %v2531 = vpack.c.bf16 %v2529, %v2527
    %v2532 = vpack.c.bf16 %v2530, %v2528
    %v2533 = vld [vmem:[#allocation8] sm:$0xf]
    %v2534 = vld [vmem:[#allocation8 + $0x4] sm:$0xf]
    %v2535 = vld [vmem:[#allocation8 + $0x8] sm:$0xf]
    %v2536 = vld [vmem:[#allocation8 + $0xc] sm:$0xf]
    %v2537 = vld [vmem:[#allocation8 + $0x10] sm:$0xf]
    %v2538 = vld [vmem:[#allocation8 + $0x14] sm:$0xf]
    %v2539 = vld [vmem:[#allocation8 + $0x18] sm:$0xf]
    %v2540 = vld [vmem:[#allocation8 + $0x1c] sm:$0xf]
    %v2541 = vld [vmem:[#allocation8 + $0x20] sm:$0xf]
    %v2542 = vld [vmem:[#allocation8 + $0x24] sm:$0xf]
    %v2543 = vld [vmem:[#allocation8 + $0x28] sm:$0xf]
    %v2544 = vld [vmem:[#allocation8 + $0x2c] sm:$0xf]
    %v2545 = vld [vmem:[#allocation8 + $0x30] sm:$0xf]
    %v2546 = vld [vmem:[#allocation8 + $0x34] sm:$0xf]
    %v2547 = vld [vmem:[#allocation8 + $0x38] sm:$0xf]
    %v2548 = vld [vmem:[#allocation8 + $0x3c] sm:$0xf]
    %v2549 = vld [vmem:[#allocation8 + $0x40] sm:$0xf]
    %v2550 = vld [vmem:[#allocation8 + $0x44] sm:$0xf]
    %v2551 = vld [vmem:[#allocation8 + $0x48] sm:$0xf]
    %v2552 = vld [vmem:[#allocation8 + $0x4c] sm:$0xf]
    %v2553 = vld [vmem:[#allocation8 + $0x50] sm:$0xf]
    %v2554 = vld [vmem:[#allocation8 + $0x54] sm:$0xf]
    %v2555 = vld [vmem:[#allocation8 + $0x58] sm:$0xf]
    %v2556 = vld [vmem:[#allocation8 + $0x5c] sm:$0xf]
    %v2557 = vld [vmem:[#allocation8 + $0x60] sm:$0xf]
    %v2558 = vld [vmem:[#allocation8 + $0x64] sm:$0xf]
    %v2559 = vld [vmem:[#allocation8 + $0x68] sm:$0xf]
    %v2560 = vld [vmem:[#allocation8 + $0x6c] sm:$0xf]
    %v2561 = vld [vmem:[#allocation8 + $0x70] sm:$0xf]
    %v2562 = vld [vmem:[#allocation8 + $0x74] sm:$0xf]
    %v2563 = vld [vmem:[#allocation8 + $0x78] sm:$0xf]
    %v2564 = vld [vmem:[#allocation8 + $0x7c] sm:$0xf]
    %v2565 = vld [vmem:[%s6] sm:$0x1]
    %v2567 = vlaneseq
    %v2568 = vshrl.u32 %v2567, 7
    %v2569 = vsub.s32 0, %v2568
    %v2570 = vrot.slane %v2565, %v2569
    %v2604 = vunpack.c.l.b16 %v2533
    %v2605 = vunpack.c.l.b16 %v2534
    %v2606 = vunpack.c.l.b16 %v2535
    %v2607 = vunpack.c.l.b16 %v2536
    %v2608 = vunpack.c.l.b16 %v2537
    %v2609 = vunpack.c.l.b16 %v2538
    %v2610 = vunpack.c.l.b16 %v2539
    %v2611 = vunpack.c.l.b16 %v2540
    %v2612 = vunpack.c.l.b16 %v2541
    %v2613 = vunpack.c.l.b16 %v2542
    %v2614 = vunpack.c.l.b16 %v2543
    %v2615 = vunpack.c.l.b16 %v2544
    %v2616 = vunpack.c.l.b16 %v2545
    %v2617 = vunpack.c.l.b16 %v2546
    %v2618 = vunpack.c.l.b16 %v2547
    %v2619 = vunpack.c.l.b16 %v2548
    %v2620 = vunpack.c.l.b16 %v2549
    %v2621 = vunpack.c.l.b16 %v2550
    %v2622 = vunpack.c.l.b16 %v2551
    %v2623 = vunpack.c.l.b16 %v2552
    %v2624 = vunpack.c.l.b16 %v2553
    %v2625 = vunpack.c.l.b16 %v2554
    %v2626 = vunpack.c.l.b16 %v2555
    %v2627 = vunpack.c.l.b16 %v2556
    %v2628 = vunpack.c.l.b16 %v2557
    %v2629 = vunpack.c.l.b16 %v2558
    %v2630 = vunpack.c.l.b16 %v2559
    %v2631 = vunpack.c.l.b16 %v2560
    %v2632 = vunpack.c.l.b16 %v2561
    %v2633 = vunpack.c.l.b16 %v2562
    %v2634 = vunpack.c.l.b16 %v2563
    %v2635 = vunpack.c.l.b16 %v2564
    %v2636 = vpack.c.b16 %v2605, %v2604
    %v2637 = vpack.c.b16 %v2607, %v2606
    %v2638 = vpack.c.b16 %v2609, %v2608
    %v2639 = vpack.c.b16 %v2611, %v2610
    %v2640 = vpack.c.b16 %v2613, %v2612
    %v2641 = vpack.c.b16 %v2615, %v2614
    %v2642 = vpack.c.b16 %v2617, %v2616
    %v2643 = vpack.c.b16 %v2619, %v2618
    %v2644 = vpack.c.b16 %v2621, %v2620
    %v2645 = vpack.c.b16 %v2623, %v2622
    %v2646 = vpack.c.b16 %v2625, %v2624
    %v2647 = vpack.c.b16 %v2627, %v2626
    %v2648 = vpack.c.b16 %v2629, %v2628
    %v2649 = vpack.c.b16 %v2631, %v2630
    %v2650 = vpack.c.b16 %v2633, %v2632
    %v2651 = vpack.c.b16 %v2635, %v2634
    %2668 = vmatprep.subr.bf16.mxu0 0
    %2669 = vmatpush1.bf16.msra.mxu0 %v2636
    %2670 = vmatprep.subr.bf16.mxu0 0
    %2671 = vmatpush1.bf16.msra.mxu0 %v2637
    %2672 = vmatprep.subr.bf16.mxu0 0
    %2673 = vmatpush1.bf16.msra.mxu0 %v2638
    %2674 = vmatprep.subr.bf16.mxu0 0
    %2675 = vmatpush1.bf16.msra.mxu0 %v2639
    %2676 = vmatprep.subr.bf16.mxu0 0
    %2677 = vmatpush1.bf16.msra.mxu0 %v2640
    %2678 = vmatprep.subr.bf16.mxu0 0
    %2679 = vmatpush1.bf16.msra.mxu0 %v2641
    %2680 = vmatprep.subr.bf16.mxu0 0
    %2681 = vmatpush1.bf16.msra.mxu0 %v2642
    %2682 = vmatprep.subr.bf16.mxu0 0
    %2683 = vmatpush1.bf16.msra.mxu0 %v2643
    %2684 = vmatprep.subr.bf16.mxu0 0
    %2685 = vmatpush1.bf16.msra.mxu0 %v2644
    %2686 = vmatprep.subr.bf16.mxu0 0
    %2687 = vmatpush1.bf16.msra.mxu0 %v2645
    %2688 = vmatprep.subr.bf16.mxu0 0
    %2689 = vmatpush1.bf16.msra.mxu0 %v2646
    %2690 = vmatprep.subr.bf16.mxu0 0
    %2691 = vmatpush1.bf16.msra.mxu0 %v2647
    %2692 = vmatprep.subr.bf16.mxu0 0
    %2693 = vmatpush1.bf16.msra.mxu0 %v2648
    %2694 = vmatprep.subr.bf16.mxu0 0
    %2695 = vmatpush1.bf16.msra.mxu0 %v2649
    %2696 = vmatprep.subr.bf16.mxu0 0
    %2697 = vmatpush1.bf16.msra.mxu0 %v2650
    %2698 = vmatprep.subr.bf16.mxu0 0
    %2699 = vmatpush1.bf16.msra.mxu0 %v2651
    %2700 = vmatprep.mubr.bf16.mxu0 %v2532
    %2701 = vmatmul.mubr.bf16.gmra.mrb[0].mxu0 %v2531
    %v2702 = vpop.f32.mrb[0].mxu0
    %v2703 = vadd.f32 %v2570, %v2702
    %v2704 = vpop.f32.mrb[0].mxu0
    %v2705 = vpop.f32.mrb[0].mxu0
    %v2706 = vadd.f32 %v2570, %v2705
    %v2707 = vpop.f32.mrb[0].mxu0
    %2708 = vdwg.mxu0
    %2709 = vst [vmem:[#allocation10] sm:$0xff] %v2703
    %2710 = vst [vmem:[#allocation10 + $0x8] sm:$0xff] %v2706
    // Predicated region
    $region46: #{tpu_custom_call.1} parent=1 // pred_check
      _
    $region47: #{tpu_custom_call.1} parent=1 // pred_check_branch
      %2712 = sbr.rel (0) target = $region49
    $region48: #{tpu_custom_call.1} parent=1 // pred_region
      %s2714 = ssub.s32 256, 256
      %2715 = vsyncadd [#allocation4], %s2714
      %s2716 = sshll.u32 [#allocation10], 4
      %s2717 = int_to_ptr.vmem [resolvable:$true] %s2716
      %2722 = dma.vmem_to_hbm [thread:$0]  %s2717, 256, %s7, [#allocation4], 128, 128, 8
    $region49: #{tpu_custom_call.1} parent=1 // pred_fallthru
      _
    // Predicated region
    $region50: #{tpu_custom_call.1} parent=1 // pred_check
      _
    $region51: #{tpu_custom_call.1} parent=1 // pred_check_branch
      %2724 = sbr.rel (0) target = $region53
    $region52: #{tpu_custom_call.1} parent=1 // pred_region
      %2725 = dma.done [#allocation4], 256
    $region53: #{tpu_custom_call.1} parent=1 // pred_fallthru
      _
    %2726 = vsyncpa [#allocation3], 1
    %2727 = vsyncpa [#allocation6], 1
    %2728 = vsyncpa [#allocation9], 1
    %2729 = vsyncpa [#allocation4], 1

</llo_original>
